<compile_context>
chip_gen: v5e
topology: v5e:2x2
jax: 0.10.0
libtpu: 0.0.40
codegen_flags: <defaults>
</compile_context>

<pallas_src>
import jax
import jax.numpy as jnp
import numpy as np
from jax import lax
from jax.experimental import pallas as pl
from jax.experimental.pallas import tpu as pltpu  # noqa: F401  (not needed at toy size)

# Hyper-parameters consistent with the module signature (small, deterministic).
D_MODEL = 32
D_INNER = 64
N_HEAD = 4
D_K = 8
D_V = 8
HDK = N_HEAD * D_K   # 32
HDV = N_HEAD * D_V   # 32
LN_EPS = 1e-5
NEG_INF = -1e30      # finite "minus infinity" for masking (avoids inf-inf -> NaN)

# Lane offsets inside the packed input-projection slab w_in (D_MODEL, 160):
#   [ self Wq | self Wk | self Wv | cross Wk | cross Wv ]
_IN_SQ = 0
_IN_SK = HDK
_IN_SV = 2 * HDK
_IN_CK = 2 * HDK + HDV
_IN_CV = 3 * HDK + HDV
_IN_W = 3 * HDK + 2 * HDV          # 160

# Lane offsets inside the packed mid slab w_mid (32, 96): [ cross Wq | self Wo | cross Wo ]
_MID_CQ = 0
_MID_SO = HDK
_MID_CO = HDK + D_MODEL
_MID_W = HDK + 2 * D_MODEL         # 96

# Rows of the (16, 128) f32 bias / gamma / beta slab.
_ROW_SB_QKV = 0                    # [s_bq | s_bk | s_bv]   (96 lanes)
_ROW_CB_Q = 1                      # c_bq                   (32)
_ROW_CB_KV = 2                     # [c_bk | c_bv]          (64)
_ROW_S_BO, _ROW_S_G, _ROW_S_B = 3, 4, 5
_ROW_C_BO, _ROW_C_G, _ROW_C_B = 6, 7, 8
_ROW_F_B1, _ROW_F_B2, _ROW_F_G, _ROW_F_B = 9, 10, 11, 12


# ---------------------------------------------------------------------------
# Shared math helper (pure jnp: usable inside the kernel and in the reference).
# ---------------------------------------------------------------------------
def _layer_norm(x, g, b):
    mean = jnp.mean(x, axis=-1, keepdims=True)
    var = jnp.mean((x - mean) ** 2, axis=-1, keepdims=True)
    return (x - mean) * lax.rsqrt(var + LN_EPS) * g + b


# ---------------------------------------------------------------------------
# Pallas kernel: whole decoder layer, whole batch, one invocation (VMEM-resident).
# ---------------------------------------------------------------------------
def decoder_layer_kernel(xe_ref, npm_ref, smask_ref, cmask_ref,
                         w_in_ref, w_mid_ref, f_w1_ref, f_w2_ref, vec_ref,
                         out_ref, slf_attn_ref, enc_attn_ref):
    B, Lq, _ = smask_ref.shape
    Lk = cmask_ref.shape[2]
    BLq = B * Lq
    BLk = B * Lk
    scale = jnp.float32(1.0 / (D_K ** 0.5))

    vec = vec_ref[...]

    def vrow(row, width):
        return vec[row:row + 1, 0:width]

    def split_heads(a2d, L, off, dh):
        # Lanes [off : off + N_HEAD*dh] of a (B*L, lanes) f32 array, regrouped to
        # (N_HEAD*B, L, dh), head-major (z = h*B + b, the PyTorch order). No replication.
        return jnp.concatenate(
            [a2d[:, off + h * dh: off + (h + 1) * dh].reshape(B, L, dh)
             for h in range(N_HEAD)], axis=0)

    def merge_heads(o_z):
        # (N_HEAD*B, Lq, dv) head-major -> (B*Lq, N_HEAD*dv); the following Wo matmul
        # performs the cross-head reduction inside its contraction.
        return jnp.concatenate(
            [o_z[h * B:(h + 1) * B].reshape(BLq, D_V) for h in range(N_HEAD)], axis=-1)

    def attention(q_z, k_z, v_z, mask3, attn_ref, L):
        # q_z (Z,Lq,dk) f32, k_z (Z,L,dk), v_z (Z,L,dv), mask3 (B,Lq,L) with 1.0 == masked.
        s = jnp.einsum('zqd,zkd->zqk',
                       q_z.astype(jnp.bfloat16), k_z.astype(jnp.bfloat16),
                       preferred_element_type=jnp.float32) * scale
        # Broadcast the (B,Lq,L) mask over the head axis (no 4x mask materialization).
        s4 = s.reshape(N_HEAD, B, Lq, L)
        s4 = jnp.where(mask3[None] > 0.5, jnp.float32(NEG_INF), s4)
        s = s4.reshape(N_HEAD * B, Lq, L)
        m = jnp.max(s, axis=-1, keepdims=True)
        e = jnp.exp(s - m)
        p = e / jnp.sum(e, axis=-1, keepdims=True)      # exact: rows sum to 1
        attn_ref[...] = p                               # already (n_head*B, Lq, L) head-major
        o = jnp.einsum('zqk,zkd->zqd',
                       p.astype(jnp.bfloat16), v_z.astype(jnp.bfloat16),
                       preferred_element_type=jnp.float32)
        return merge_heads(o)                           # (B*Lq, N_HEAD*dv)

    xe = xe_ref[...]                     # (B*Lq + B*Lk, D) bf16: dec rows then enc rows
    x = xe[0:BLq].astype(jnp.float32)    # decoder residual
    npm = npm_ref[...]                   # (B*Lq, 1) f32
    w_mid = w_mid_ref[...]               # (32, 96) bf16

    # --- single lane-dense input projection: self QKV on dec rows, cross K/V on enc rows,
    #     one (B*Lq+B*Lk, D) x (D, 160) MXU matmul ---
    proj = jnp.dot(xe, w_in_ref[...], preferred_element_type=jnp.float32)      # (.., 160) f32
    qkv_s = proj[0:BLq, _IN_SQ:_IN_CK] + vrow(_ROW_SB_QKV, 3 * HDK)            # (B*Lq, 96)
    kv_c = proj[BLq:BLq + BLk, _IN_CK:_IN_W] + vrow(_ROW_CB_KV, HDK + HDV)     # (B*Lk, 64)

    # ---- 1) masked self-attention + residual + layer-norm + non_pad_mask ----
    q1 = split_heads(qkv_s, Lq, _IN_SQ, D_K)
    k1 = split_heads(qkv_s, Lq, _IN_SK, D_K)
    v1 = split_heads(qkv_s, Lq, _IN_SV, D_V)
    o1 = attention(q1, k1, v1, smask_ref[...], slf_attn_ref, Lq)               # (B*Lq, 32)
    h1 = jnp.dot(o1.astype(jnp.bfloat16), w_mid[:, _MID_SO:_MID_CO],
                 preferred_element_type=jnp.float32) + vrow(_ROW_S_BO, D_MODEL)
    h1 = _layer_norm(h1 + x, vrow(_ROW_S_G, D_MODEL), vrow(_ROW_S_B, D_MODEL)) * npm

    # ---- 2) encoder-decoder attention + residual + layer-norm + non_pad_mask ----
    q2_2d = jnp.dot(h1.astype(jnp.bfloat16), w_mid[:, _MID_CQ:_MID_SO],
                    preferred_element_type=jnp.float32) + vrow(_ROW_CB_Q, HDK)
    q2 = split_heads(q2_2d, Lq, 0, D_K)
    k2 = split_heads(kv_c, Lk, 0, D_K)
    v2 = split_heads(kv_c, Lk, HDK, D_V)
    o2 = attention(q2, k2, v2, cmask_ref[...], enc_attn_ref, Lk)               # (B*Lq, 32)
    h2 = jnp.dot(o2.astype(jnp.bfloat16), w_mid[:, _MID_CO:_MID_W],
                 preferred_element_type=jnp.float32) + vrow(_ROW_C_BO, D_MODEL)
    h2 = _layer_norm(h2 + h1, vrow(_ROW_C_G, D_MODEL), vrow(_ROW_C_B, D_MODEL)) * npm

    # ---- 3) position-wise FFN (1x1 conv == per-row matmul) + residual + LN + mask ----
    y = jnp.dot(h2.astype(jnp.bfloat16), f_w1_ref[...],
                preferred_element_type=jnp.float32) + vrow(_ROW_F_B1, D_INNER)
    y = jnp.maximum(y, 0.0)
    y = jnp.dot(y.astype(jnp.bfloat16), f_w2_ref[...],
                preferred_element_type=jnp.float32) + vrow(_ROW_F_B2, D_MODEL)
    y = _layer_norm(y + h2, vrow(_ROW_F_G, D_MODEL), vrow(_ROW_F_B, D_MODEL)) * npm
    out_ref[...] = y


# ---------------------------------------------------------------------------
# Parameter packing: done ONCE, outside the per-call path.
# ---------------------------------------------------------------------------
def pack_params(p):
    """Pack the 26 module parameters into 5 small lane-dense kernel inputs."""
    w_in = jnp.concatenate(
        [p["s_wq"], p["s_wk"], p["s_wv"], p["c_wk"], p["c_wv"]], axis=1)   # (32, 160)
    w_mid = jnp.concatenate(
        [p["c_wq"], p["s_wo"], p["c_wo"]], axis=1)                         # (32, 96)

    vec = np.zeros((16, 128), np.float32)
    rows = {
        _ROW_SB_QKV: jnp.concatenate([p["s_bq"], p["s_bk"], p["s_bv"]], axis=1),
        _ROW_CB_Q: p["c_bq"],
        _ROW_CB_KV: jnp.concatenate([p["c_bk"], p["c_bv"]], axis=1),
        _ROW_S_BO: p["s_bo"], _ROW_S_G: p["s_g"], _ROW_S_B: p["s_b"],
        _ROW_C_BO: p["c_bo"], _ROW_C_G: p["c_g"], _ROW_C_B: p["c_b"],
        _ROW_F_B1: p["f_b1"], _ROW_F_B2: p["f_b2"],
        _ROW_F_G: p["f_g"], _ROW_F_B: p["f_b"],
    }
    for r, val in rows.items():
        flat = np.asarray(val).reshape(-1)
        vec[r, :flat.shape[0]] = flat

    return dict(
        w_in=w_in.astype(jnp.bfloat16),
        w_mid=w_mid.astype(jnp.bfloat16),
        f_w1=p["f_w1"].astype(jnp.bfloat16),
        f_w2=p["f_w2"].astype(jnp.bfloat16),
        vec=jnp.asarray(vec),
    )


# ---------------------------------------------------------------------------
# Wrapper: one grid-less pallas_call (whole problem is VMEM-resident).
# ---------------------------------------------------------------------------
@jax.jit
def decoder_layer(dec_input, enc_output, non_pad_mask, slf_attn_mask,
                  dec_enc_attn_mask, packed):
    B, Lq, _ = dec_input.shape
    Lk = enc_output.shape[1]
    Z = N_HEAD * B
    # Stack dec and enc rows so the self-QKV and cross-K/V projections share one MXU
    # matmul inside the kernel; activations travel as bf16 (halved DMA bytes).
    xe = jnp.concatenate([dec_input.reshape(B * Lq, D_MODEL),
                          enc_output.reshape(B * Lk, D_MODEL)],
                         axis=0).astype(jnp.bfloat16)

    out2d, slf_attn, enc_attn = pl.pallas_call(
        decoder_layer_kernel,
        out_shape=(
            jax.ShapeDtypeStruct((B * Lq, D_MODEL), jnp.float32),
            jax.ShapeDtypeStruct((Z, Lq, Lq), jnp.float32),   # (n_head*B, lq, lq) head-major
            jax.ShapeDtypeStruct((Z, Lq, Lk), jnp.float32),   # (n_head*B, lq, lk) head-major
        ),
    )(
        xe,
        non_pad_mask.reshape(B * Lq, 1),
        slf_attn_mask,
        dec_enc_attn_mask,
        packed["w_in"], packed["w_mid"], packed["f_w1"], packed["f_w2"], packed["vec"],
    )
    return out2d.reshape(B, Lq, D_MODEL), slf_attn, enc_attn


# ---------------------------------------------------------------------------
# Deterministic parameter init (synthetic; shapes follow the module __init__)
# ---------------------------------------------------------------------------
def init_params(key):
    keys = iter(jax.random.split(key, 32))

    def nrm(shape, scale):
        return (scale * jax.random.normal(next(keys), shape)).astype(jnp.float32)

    def attn_block():
        s_qk = (2.0 / (D_MODEL + D_K)) ** 0.5
        s_v = (2.0 / (D_MODEL + D_V)) ** 0.5
        s_o = (2.0 / (N_HEAD * D_V + D_MODEL)) ** 0.5
        return dict(
            wq=nrm((D_MODEL, N_HEAD * D_K), s_qk),
            wk=nrm((D_MODEL, N_HEAD * D_K), s_qk),
            wv=nrm((D_MODEL, N_HEAD * D_V), s_v),
            wo=nrm((N_HEAD * D_V, D_MODEL), s_o),
            bq=nrm((1, N_HEAD * D_K), 0.02),
            bk=nrm((1, N_HEAD * D_K), 0.02),
            bv=nrm((1, N_HEAD * D_V), 0.02),
            bo=nrm((1, D_MODEL), 0.02),
            g=jnp.ones((1, D_MODEL), jnp.float32),
            b=jnp.zeros((1, D_MODEL), jnp.float32),
        )

    s = attn_block()
    c = attn_block()
    params = {("s_" + k): v for k, v in s.items()}
    params.update({("c_" + k): v for k, v in c.items()})
    params.update(dict(
        f_w1=nrm((D_MODEL, D_INNER), (1.0 / D_MODEL) ** 0.5),
        f_b1=nrm((1, D_INNER), 0.02),
        f_w2=nrm((D_INNER, D_MODEL), (1.0 / D_INNER) ** 0.5),
        f_b2=nrm((1, D_MODEL), 0.02),
        f_g=jnp.ones((1, D_MODEL), jnp.float32),
        f_b=jnp.zeros((1, D_MODEL), jnp.float32),
    ))
    return params


# ---------------------------------------------------------------------------
# Pure-JAX f32 reference (mirrors the PyTorch forward in eval mode)
# ---------------------------------------------------------------------------
def _ref_mha(xq, xkv, mask, wq, bq, wk, bk, wv, bv, wo, bo, g, beta):
    B, Lq, _ = xq.shape
    Lk = xkv.shape[1]
    q = (xq @ wq + bq).reshape(B, Lq, N_HEAD, D_K).transpose(0, 2, 1, 3)
    k = (xkv @ wk + bk).reshape(B, Lk, N_HEAD, D_K).transpose(0, 2, 1, 3)
    v = (xkv @ wv + bv).reshape(B, Lk, N_HEAD, D_V).transpose(0, 2, 1, 3)
    sc = jnp.einsum("bhqd,bhkd->bhqk", q, k) / (D_K ** 0.5)
    sc = jnp.where(mask[:, None, :, :] > 0.5, -jnp.inf, sc)
    attn = jax.nn.softmax(sc, axis=-1)
    o = jnp.einsum("bhqk,bhkd->bhqd", attn, v)
    o = o.transpose(0, 2, 1, 3).reshape(B, Lq, N_HEAD * D_V)
    o = o @ wo + bo
    o = _layer_norm(o + xq, g, beta)
    return o, attn


def ref_decoder_layer(dec, enc, npm, slf_mask, enc_mask, p):
    B, Lq, _ = dec.shape
    Lk = enc.shape[1]
    h1, a1 = _ref_mha(dec, dec, slf_mask,
                      p["s_wq"], p["s_bq"], p["s_wk"], p["s_bk"], p["s_wv"], p["s_bv"],
                      p["s_wo"], p["s_bo"], p["s_g"], p["s_b"])
    h1 = h1 * npm
    h2, a2 = _ref_mha(h1, enc, enc_mask,
                      p["c_wq"], p["c_bq"], p["c_wk"], p["c_bk"], p["c_wv"], p["c_bv"],
                      p["c_wo"], p["c_bo"], p["c_g"], p["c_b"])
    h2 = h2 * npm
    y = jnp.maximum(h2 @ p["f_w1"] + p["f_b1"], 0.0)
    y = y @ p["f_w2"] + p["f_b2"]
    y = _layer_norm(y + h2, p["f_g"], p["f_b"])
    y = y * npm
    a1 = jnp.transpose(a1, (1, 0, 2, 3)).reshape(N_HEAD * B, Lq, Lq)
    a2 = jnp.transpose(a2, (1, 0, 2, 3)).reshape(N_HEAD * B, Lq, Lk)
    return y, a1, a2


# ---------------------------------------------------------------------------
if __name__ == "__main__":
    B, Lq, Lk = 2, 8, 16
    key = jax.random.PRNGKey(0)
    k_dec, k_enc, k_p = jax.random.split(key, 3)

    dec_input = jax.random.normal(k_dec, (B, Lq, D_MODEL), dtype=jnp.float32)
    enc_output = jax.random.normal(k_enc, (B, Lk, D_MODEL), dtype=jnp.float32)

    # non_pad_mask (B, Lq, 1): 1.0 valid, 0.0 padded
    non_pad_mask = jnp.ones((B, Lq, 1), jnp.float32).at[1, Lq - 2:, :].set(0.0)
    # slf_attn_mask (B, Lq, Lq): causal mask, 1.0 == masked
    slf_attn_mask = jnp.broadcast_to(
        jnp.triu(jnp.ones((Lq, Lq), jnp.float32), k=1), (B, Lq, Lq)).astype(jnp.float32)
    # dec_enc_attn_mask (B, Lq, Lk): mask last 4 (padded) encoder positions
    dec_enc_attn_mask = jnp.zeros((B, Lq, Lk), jnp.float32).at[:, :, Lk - 4:].set(1.0)

    params = init_params(k_p)
    packed = pack_params(params)   # packed ONCE, outside the per-call path

    outs = decoder_layer(dec_input, enc_output, non_pad_mask,
                         slf_attn_mask, dec_enc_attn_mask, packed)
    dec_out, slf_attn, enc_attn = jax.block_until_ready(outs)

    ref_out, ref_slf, ref_enc = ref_decoder_layer(
        dec_input, enc_output, non_pad_mask, slf_attn_mask, dec_enc_attn_mask, params)

    assert dec_out.shape == (B, Lq, D_MODEL)
    assert slf_attn.shape == (N_HEAD * B, Lq, Lq)
    assert enc_attn.shape == (N_HEAD * B, Lq, Lk)
    np.testing.assert_allclose(np.asarray(dec_out), np.asarray(ref_out), atol=5e-2, rtol=5e-2)
    np.testing.assert_allclose(np.asarray(slf_attn), np.asarray(ref_slf), atol=5e-2, rtol=5e-2)
    np.testing.assert_allclose(np.asarray(enc_attn), np.asarray(ref_enc), atol=5e-2, rtol=5e-2)

    print("KERNEL_OK")
</pallas_src>

<mosaic_0001>
module attributes {stable_mosaic.version = 11 : i64} {
  func.func @decoder_layer_kernel(%arg0: memref<48x32xbf16, #tpu.memory_space<vmem>>, %arg1: memref<16x1xf32, #tpu.memory_space<vmem>>, %arg2: memref<2x8x8xf32, #tpu.memory_space<vmem>>, %arg3: memref<2x8x16xf32, #tpu.memory_space<vmem>>, %arg4: memref<32x160xbf16, #tpu.memory_space<vmem>>, %arg5: memref<32x96xbf16, #tpu.memory_space<vmem>>, %arg6: memref<32x64xbf16, #tpu.memory_space<vmem>>, %arg7: memref<64x32xbf16, #tpu.memory_space<vmem>>, %arg8: memref<16x128xf32, #tpu.memory_space<vmem>>, %arg9: memref<16x32xf32, #tpu.memory_space<vmem>>, %arg10: memref<8x8x8xf32, #tpu.memory_space<vmem>>, %arg11: memref<8x8x16xf32, #tpu.memory_space<vmem>>) attributes {dimension_semantics = [], scalar_prefetch = 0 : i64, scratch_operands = 0 : i64, tpu.core_type = #tpu.core_type<tc>} {
    %c0 = arith.constant 0 : index
    %c0_0 = arith.constant 0 : index
    %0 = vector.load %arg8[%c0, %c0_0] : memref<16x128xf32, #tpu.memory_space<vmem>>, vector<16x128xf32>
    %c0_1 = arith.constant 0 : index
    %c0_2 = arith.constant 0 : index
    %1 = vector.load %arg0[%c0_1, %c0_2] : memref<48x32xbf16, #tpu.memory_space<vmem>>, vector<48x32xbf16>
    %2 = vector.extract_strided_slice %1 {offsets = [0, 0], sizes = [16, 32], strides = [1, 1]} : vector<48x32xbf16> to vector<16x32xbf16>
    %3 = arith.extf %2 : vector<16x32xbf16> to vector<16x32xf32>
    %c0_3 = arith.constant 0 : index
    %c0_4 = arith.constant 0 : index
    %4 = vector.load %arg1[%c0_3, %c0_4] : memref<16x1xf32, #tpu.memory_space<vmem>>, vector<16x1xf32>
    %c0_5 = arith.constant 0 : index
    %c0_6 = arith.constant 0 : index
    %5 = vector.load %arg5[%c0_5, %c0_6] : memref<32x96xbf16, #tpu.memory_space<vmem>>, vector<32x96xbf16>
    %c0_7 = arith.constant 0 : index
    %c0_8 = arith.constant 0 : index
    %6 = vector.load %arg4[%c0_7, %c0_8] : memref<32x160xbf16, #tpu.memory_space<vmem>>, vector<32x160xbf16>
    %cst = arith.constant dense<0.000000e+00> : vector<48x160xf32>
    %7 = tpu.matmul %1, %6, %cst {dimension_numbers = #tpu.dot_dimension_numbers<[1], [0], [0], [1], [0, 0, 1, 1], [], []>} : vector<48x32xbf16>, vector<32x160xbf16>, vector<48x160xf32> -> vector<48x160xf32>
    %8 = vector.extract_strided_slice %7 {offsets = [0, 0], sizes = [16, 96], strides = [1, 1]} : vector<48x160xf32> to vector<16x96xf32>
    %9 = vector.extract_strided_slice %0 {offsets = [0, 0], sizes = [1, 96], strides = [1, 1]} : vector<16x128xf32> to vector<1x96xf32>
    %10 = vector.broadcast %9 : vector<1x96xf32> to vector<16x96xf32>
    %11 = arith.addf %8, %10 : vector<16x96xf32>
    %12 = vector.extract_strided_slice %7 {offsets = [16, 96], sizes = [32, 64], strides = [1, 1]} : vector<48x160xf32> to vector<32x64xf32>
    %13 = vector.extract_strided_slice %0 {offsets = [2, 0], sizes = [1, 64], strides = [1, 1]} : vector<16x128xf32> to vector<1x64xf32>
    %14 = vector.broadcast %13 : vector<1x64xf32> to vector<32x64xf32>
    %15 = arith.addf %12, %14 : vector<32x64xf32>
    %16 = vector.extract_strided_slice %11 {offsets = [0, 0], sizes = [16, 8], strides = [1, 1]} : vector<16x96xf32> to vector<16x8xf32>
    %17 = vector.shape_cast %16 : vector<16x8xf32> to vector<2x8x8xf32>
    %18 = vector.extract_strided_slice %11 {offsets = [0, 8], sizes = [16, 8], strides = [1, 1]} : vector<16x96xf32> to vector<16x8xf32>
    %19 = vector.shape_cast %18 : vector<16x8xf32> to vector<2x8x8xf32>
    %20 = vector.extract_strided_slice %11 {offsets = [0, 16], sizes = [16, 8], strides = [1, 1]} : vector<16x96xf32> to vector<16x8xf32>
    %21 = vector.shape_cast %20 : vector<16x8xf32> to vector<2x8x8xf32>
    %22 = vector.extract_strided_slice %11 {offsets = [0, 24], sizes = [16, 8], strides = [1, 1]} : vector<16x96xf32> to vector<16x8xf32>
    %23 = vector.shape_cast %22 : vector<16x8xf32> to vector<2x8x8xf32>
    %24 = tpu.concatenate %17, %19, %21, %23 in 0 : vector<2x8x8xf32>, vector<2x8x8xf32>, vector<2x8x8xf32>, vector<2x8x8xf32> -> vector<8x8x8xf32>
    %25 = vector.extract_strided_slice %11 {offsets = [0, 32], sizes = [16, 8], strides = [1, 1]} : vector<16x96xf32> to vector<16x8xf32>
    %26 = vector.shape_cast %25 : vector<16x8xf32> to vector<2x8x8xf32>
    %27 = vector.extract_strided_slice %11 {offsets = [0, 40], sizes = [16, 8], strides = [1, 1]} : vector<16x96xf32> to vector<16x8xf32>
    %28 = vector.shape_cast %27 : vector<16x8xf32> to vector<2x8x8xf32>
    %29 = vector.extract_strided_slice %11 {offsets = [0, 48], sizes = [16, 8], strides = [1, 1]} : vector<16x96xf32> to vector<16x8xf32>
    %30 = vector.shape_cast %29 : vector<16x8xf32> to vector<2x8x8xf32>
    %31 = vector.extract_strided_slice %11 {offsets = [0, 56], sizes = [16, 8], strides = [1, 1]} : vector<16x96xf32> to vector<16x8xf32>
    %32 = vector.shape_cast %31 : vector<16x8xf32> to vector<2x8x8xf32>
    %33 = tpu.concatenate %26, %28, %30, %32 in 0 : vector<2x8x8xf32>, vector<2x8x8xf32>, vector<2x8x8xf32>, vector<2x8x8xf32> -> vector<8x8x8xf32>
    %34 = vector.extract_strided_slice %11 {offsets = [0, 64], sizes = [16, 8], strides = [1, 1]} : vector<16x96xf32> to vector<16x8xf32>
    %35 = vector.shape_cast %34 : vector<16x8xf32> to vector<2x8x8xf32>
    %36 = vector.extract_strided_slice %11 {offsets = [0, 72], sizes = [16, 8], strides = [1, 1]} : vector<16x96xf32> to vector<16x8xf32>
    %37 = vector.shape_cast %36 : vector<16x8xf32> to vector<2x8x8xf32>
    %38 = vector.extract_strided_slice %11 {offsets = [0, 80], sizes = [16, 8], strides = [1, 1]} : vector<16x96xf32> to vector<16x8xf32>
    %39 = vector.shape_cast %38 : vector<16x8xf32> to vector<2x8x8xf32>
    %40 = vector.extract_strided_slice %11 {offsets = [0, 88], sizes = [16, 8], strides = [1, 1]} : vector<16x96xf32> to vector<16x8xf32>
    %41 = vector.shape_cast %40 : vector<16x8xf32> to vector<2x8x8xf32>
    %42 = tpu.concatenate %35, %37, %39, %41 in 0 : vector<2x8x8xf32>, vector<2x8x8xf32>, vector<2x8x8xf32>, vector<2x8x8xf32> -> vector<8x8x8xf32>
    %c0_9 = arith.constant 0 : index
    %c0_10 = arith.constant 0 : index
    %c0_11 = arith.constant 0 : index
    %43 = vector.load %arg2[%c0_9, %c0_10, %c0_11] : memref<2x8x8xf32, #tpu.memory_space<vmem>>, vector<2x8x8xf32>
    %44 = arith.truncf %24 : vector<8x8x8xf32> to vector<8x8x8xbf16>
    %45 = arith.truncf %33 : vector<8x8x8xf32> to vector<8x8x8xbf16>
    "tpu.trace_start"() <{level = 10 : i32, message = "zqd,zkd->zqk"}> : () -> ()
    %cst_12 = arith.constant dense<0.000000e+00> : vector<8x8x8xf32>
    %46 = tpu.matmul %44, %45, %cst_12 {dimension_numbers = #tpu.dot_dimension_numbers<[2], [2], [1], [1], [0, 0, 0, 1, 1, 1], [0], [0]>} : vector<8x8x8xbf16>, vector<8x8x8xbf16>, vector<8x8x8xf32> -> vector<8x8x8xf32>
    "tpu.trace_stop"() : () -> ()
    %cst_13 = arith.constant 0.353553385 : f32
    %47 = vector.broadcast %cst_13 : f32 to vector<8x8x8xf32>
    %48 = arith.mulf %46, %47 : vector<8x8x8xf32>
    %49 = vector.shape_cast %48 : vector<8x8x8xf32> to vector<4x2x8x8xf32>
    %50 = vector.shape_cast %43 : vector<2x8x8xf32> to vector<1x2x8x8xf32>
    %cst_14 = arith.constant 5.000000e-01 : f32
    %51 = vector.broadcast %cst_14 : f32 to vector<1x2x8x8xf32>
    %52 = arith.cmpf ogt, %50, %51 : vector<1x2x8x8xf32>
    %cst_15 = arith.constant -1.000000e+30 : f32
    %53 = vector.shape_cast %52 : vector<1x2x8x8xi1> to vector<1x2x8x8xi1>
    %54 = vector.broadcast %53 : vector<1x2x8x8xi1> to vector<4x2x8x8xi1>
    %55 = vector.broadcast %cst_15 : f32 to vector<4x2x8x8xf32>
    %56 = arith.select %54, %55, %49 : vector<4x2x8x8xi1>, vector<4x2x8x8xf32>
    %57 = vector.shape_cast %56 : vector<4x2x8x8xf32> to vector<8x8x8xf32>
    %cst_16 = arith.constant dense<0xFF800000> : vector<8x8xf32>
    %58 = vector.multi_reduction <maximumf>, %57, %cst_16 [2] : vector<8x8x8xf32> to vector<8x8xf32>
    %59 = vector.shape_cast %58 : vector<8x8xf32> to vector<8x8x1xf32>
    %60 = vector.broadcast %59 : vector<8x8x1xf32> to vector<8x8x8xf32>
    %61 = arith.subf %57, %60 : vector<8x8x8xf32>
    %62 = math.exp %61 : vector<8x8x8xf32>
    %cst_17 = arith.constant dense<0.000000e+00> : vector<8x8xf32>
    %63 = vector.multi_reduction <add>, %62, %cst_17 [2] : vector<8x8x8xf32> to vector<8x8xf32>
    %64 = vector.shape_cast %63 : vector<8x8xf32> to vector<8x8x1xf32>
    %65 = vector.broadcast %64 : vector<8x8x1xf32> to vector<8x8x8xf32>
    %66 = arith.divf %62, %65 : vector<8x8x8xf32>
    %c0_18 = arith.constant 0 : index
    %c0_19 = arith.constant 0 : index
    %c0_20 = arith.constant 0 : index
    %67 = vector.load %arg10[%c0_18, %c0_19, %c0_20] : memref<8x8x8xf32, #tpu.memory_space<vmem>>, vector<8x8x8xf32>
    tpu.vector_store %arg10[%c0_18, %c0_19, %c0_20], %66 {strides = array<i32>} : memref<8x8x8xf32, #tpu.memory_space<vmem>>, vector<8x8x8xf32>,
    %68 = arith.truncf %66 : vector<8x8x8xf32> to vector<8x8x8xbf16>
    %69 = arith.truncf %42 : vector<8x8x8xf32> to vector<8x8x8xbf16>
    "tpu.trace_start"() <{level = 10 : i32, message = "zqk,zkd->zqd"}> : () -> ()
    %cst_21 = arith.constant dense<0.000000e+00> : vector<8x8x8xf32>
    %70 = tpu.matmul %68, %69, %cst_21 {dimension_numbers = #tpu.dot_dimension_numbers<[2], [1], [1], [2], [0, 0, 0, 1, 1, 2], [0], [0]>} : vector<8x8x8xbf16>, vector<8x8x8xbf16>, vector<8x8x8xf32> -> vector<8x8x8xf32>
    "tpu.trace_stop"() : () -> ()
    %71 = vector.extract_strided_slice %70 {offsets = [0, 0, 0], sizes = [2, 8, 8], strides = [1, 1, 1]} : vector<8x8x8xf32> to vector<2x8x8xf32>
    %72 = vector.shape_cast %71 : vector<2x8x8xf32> to vector<16x8xf32>
    %73 = vector.extract_strided_slice %70 {offsets = [2, 0, 0], sizes = [2, 8, 8], strides = [1, 1, 1]} : vector<8x8x8xf32> to vector<2x8x8xf32>
    %74 = vector.shape_cast %73 : vector<2x8x8xf32> to vector<16x8xf32>
    %75 = vector.extract_strided_slice %70 {offsets = [4, 0, 0], sizes = [2, 8, 8], strides = [1, 1, 1]} : vector<8x8x8xf32> to vector<2x8x8xf32>
    %76 = vector.shape_cast %75 : vector<2x8x8xf32> to vector<16x8xf32>
    %77 = vector.extract_strided_slice %70 {offsets = [6, 0, 0], sizes = [2, 8, 8], strides = [1, 1, 1]} : vector<8x8x8xf32> to vector<2x8x8xf32>
    %78 = vector.shape_cast %77 : vector<2x8x8xf32> to vector<16x8xf32>
    %79 = tpu.concatenate %72, %74, %76, %78 in 1 : vector<16x8xf32>, vector<16x8xf32>, vector<16x8xf32>, vector<16x8xf32> -> vector<16x32xf32>
    %80 = arith.truncf %79 : vector<16x32xf32> to vector<16x32xbf16>
    %81 = vector.extract_strided_slice %5 {offsets = [0, 32], sizes = [32, 32], strides = [1, 1]} : vector<32x96xbf16> to vector<32x32xbf16>
    %cst_22 = arith.constant dense<0.000000e+00> : vector<16x32xf32>
    %82 = tpu.matmul %80, %81, %cst_22 {dimension_numbers = #tpu.dot_dimension_numbers<[1], [0], [0], [1], [0, 0, 1, 1], [], []>} : vector<16x32xbf16>, vector<32x32xbf16>, vector<16x32xf32> -> vector<16x32xf32>
    %83 = vector.extract_strided_slice %0 {offsets = [3, 0], sizes = [1, 32], strides = [1, 1]} : vector<16x128xf32> to vector<1x32xf32>
    %84 = vector.broadcast %83 : vector<1x32xf32> to vector<16x32xf32>
    %85 = arith.addf %82, %84 : vector<16x32xf32>
    %86 = arith.addf %85, %3 : vector<16x32xf32>
    %87 = vector.extract_strided_slice %0 {offsets = [4, 0], sizes = [1, 32], strides = [1, 1]} : vector<16x128xf32> to vector<1x32xf32>
    %88 = vector.extract_strided_slice %0 {offsets = [5, 0], sizes = [1, 32], strides = [1, 1]} : vector<16x128xf32> to vector<1x32xf32>
    %cst_23 = arith.constant dense<0.000000e+00> : vector<16xf32>
    %89 = vector.multi_reduction <add>, %86, %cst_23 [1] : vector<16x32xf32> to vector<16xf32>
    %90 = vector.shape_cast %89 : vector<16xf32> to vector<16x1xf32>
    %cst_24 = arith.constant 3.200000e+01 : f32
    %91 = vector.broadcast %cst_24 : f32 to vector<16x1xf32>
    %92 = arith.divf %90, %91 : vector<16x1xf32>
    %93 = vector.broadcast %92 : vector<16x1xf32> to vector<16x32xf32>
    %94 = arith.subf %86, %93 : vector<16x32xf32>
    %95 = arith.mulf %94, %94 : vector<16x32xf32>
    %cst_25 = arith.constant dense<0.000000e+00> : vector<16xf32>
    %96 = vector.multi_reduction <add>, %95, %cst_25 [1] : vector<16x32xf32> to vector<16xf32>
    %97 = vector.shape_cast %96 : vector<16xf32> to vector<16x1xf32>
    %cst_26 = arith.constant 3.200000e+01 : f32
    %98 = vector.broadcast %cst_26 : f32 to vector<16x1xf32>
    %99 = arith.divf %97, %98 : vector<16x1xf32>
    %100 = vector.broadcast %92 : vector<16x1xf32> to vector<16x32xf32>
    %101 = arith.subf %86, %100 : vector<16x32xf32>
    %cst_27 = arith.constant 9.99999974E-6 : f32
    %102 = vector.broadcast %cst_27 : f32 to vector<16x1xf32>
    %103 = arith.addf %99, %102 : vector<16x1xf32>
    %104 = math.rsqrt %103 : vector<16x1xf32>
    %105 = vector.broadcast %104 : vector<16x1xf32> to vector<16x32xf32>
    %106 = arith.mulf %101, %105 : vector<16x32xf32>
    %107 = vector.broadcast %87 : vector<1x32xf32> to vector<16x32xf32>
    %108 = arith.mulf %106, %107 : vector<16x32xf32>
    %109 = vector.broadcast %88 : vector<1x32xf32> to vector<16x32xf32>
    %110 = arith.addf %108, %109 : vector<16x32xf32>
    %111 = vector.broadcast %4 : vector<16x1xf32> to vector<16x32xf32>
    %112 = arith.mulf %110, %111 : vector<16x32xf32>
    %113 = arith.truncf %112 : vector<16x32xf32> to vector<16x32xbf16>
    %114 = vector.extract_strided_slice %5 {offsets = [0, 0], sizes = [32, 32], strides = [1, 1]} : vector<32x96xbf16> to vector<32x32xbf16>
    %cst_28 = arith.constant dense<0.000000e+00> : vector<16x32xf32>
    %115 = tpu.matmul %113, %114, %cst_28 {dimension_numbers = #tpu.dot_dimension_numbers<[1], [0], [0], [1], [0, 0, 1, 1], [], []>} : vector<16x32xbf16>, vector<32x32xbf16>, vector<16x32xf32> -> vector<16x32xf32>
    %116 = vector.extract_strided_slice %0 {offsets = [1, 0], sizes = [1, 32], strides = [1, 1]} : vector<16x128xf32> to vector<1x32xf32>
    %117 = vector.broadcast %116 : vector<1x32xf32> to vector<16x32xf32>
    %118 = arith.addf %115, %117 : vector<16x32xf32>
    %119 = vector.extract_strided_slice %118 {offsets = [0, 0], sizes = [16, 8], strides = [1, 1]} : vector<16x32xf32> to vector<16x8xf32>
    %120 = vector.shape_cast %119 : vector<16x8xf32> to vector<2x8x8xf32>
    %121 = vector.extract_strided_slice %118 {offsets = [0, 8], sizes = [16, 8], strides = [1, 1]} : vector<16x32xf32> to vector<16x8xf32>
    %122 = vector.shape_cast %121 : vector<16x8xf32> to vector<2x8x8xf32>
    %123 = vector.extract_strided_slice %118 {offsets = [0, 16], sizes = [16, 8], strides = [1, 1]} : vector<16x32xf32> to vector<16x8xf32>
    %124 = vector.shape_cast %123 : vector<16x8xf32> to vector<2x8x8xf32>
    %125 = vector.extract_strided_slice %118 {offsets = [0, 24], sizes = [16, 8], strides = [1, 1]} : vector<16x32xf32> to vector<16x8xf32>
    %126 = vector.shape_cast %125 : vector<16x8xf32> to vector<2x8x8xf32>
    %127 = tpu.concatenate %120, %122, %124, %126 in 0 : vector<2x8x8xf32>, vector<2x8x8xf32>, vector<2x8x8xf32>, vector<2x8x8xf32> -> vector<8x8x8xf32>
    %128 = vector.extract_strided_slice %15 {offsets = [0, 0], sizes = [32, 8], strides = [1, 1]} : vector<32x64xf32> to vector<32x8xf32>
    %129 = vector.shape_cast %128 : vector<32x8xf32> to vector<2x16x8xf32>
    %130 = vector.extract_strided_slice %15 {offsets = [0, 8], sizes = [32, 8], strides = [1, 1]} : vector<32x64xf32> to vector<32x8xf32>
    %131 = vector.shape_cast %130 : vector<32x8xf32> to vector<2x16x8xf32>
    %132 = vector.extract_strided_slice %15 {offsets = [0, 16], sizes = [32, 8], strides = [1, 1]} : vector<32x64xf32> to vector<32x8xf32>
    %133 = vector.shape_cast %132 : vector<32x8xf32> to vector<2x16x8xf32>
    %134 = vector.extract_strided_slice %15 {offsets = [0, 24], sizes = [32, 8], strides = [1, 1]} : vector<32x64xf32> to vector<32x8xf32>
    %135 = vector.shape_cast %134 : vector<32x8xf32> to vector<2x16x8xf32>
    %136 = tpu.concatenate %129, %131, %133, %135 in 0 : vector<2x16x8xf32>, vector<2x16x8xf32>, vector<2x16x8xf32>, vector<2x16x8xf32> -> vector<8x16x8xf32>
    %137 = vector.extract_strided_slice %15 {offsets = [0, 32], sizes = [32, 8], strides = [1, 1]} : vector<32x64xf32> to vector<32x8xf32>
    %138 = vector.shape_cast %137 : vector<32x8xf32> to vector<2x16x8xf32>
    %139 = vector.extract_strided_slice %15 {offsets = [0, 40], sizes = [32, 8], strides = [1, 1]} : vector<32x64xf32> to vector<32x8xf32>
    %140 = vector.shape_cast %139 : vector<32x8xf32> to vector<2x16x8xf32>
    %141 = vector.extract_strided_slice %15 {offsets = [0, 48], sizes = [32, 8], strides = [1, 1]} : vector<32x64xf32> to vector<32x8xf32>
    %142 = vector.shape_cast %141 : vector<32x8xf32> to vector<2x16x8xf32>
    %143 = vector.extract_strided_slice %15 {offsets = [0, 56], sizes = [32, 8], strides = [1, 1]} : vector<32x64xf32> to vector<32x8xf32>
    %144 = vector.shape_cast %143 : vector<32x8xf32> to vector<2x16x8xf32>
    %145 = tpu.concatenate %138, %140, %142, %144 in 0 : vector<2x16x8xf32>, vector<2x16x8xf32>, vector<2x16x8xf32>, vector<2x16x8xf32> -> vector<8x16x8xf32>
    %c0_29 = arith.constant 0 : index
    %c0_30 = arith.constant 0 : index
    %c0_31 = arith.constant 0 : index
    %146 = vector.load %arg3[%c0_29, %c0_30, %c0_31] : memref<2x8x16xf32, #tpu.memory_space<vmem>>, vector<2x8x16xf32>
    %147 = arith.truncf %127 : vector<8x8x8xf32> to vector<8x8x8xbf16>
    %148 = arith.truncf %136 : vector<8x16x8xf32> to vector<8x16x8xbf16>
    "tpu.trace_start"() <{level = 10 : i32, message = "zqd,zkd->zqk"}> : () -> ()
    %cst_32 = arith.constant dense<0.000000e+00> : vector<8x8x16xf32>
    %149 = tpu.matmul %147, %148, %cst_32 {dimension_numbers = #tpu.dot_dimension_numbers<[2], [2], [1], [1], [0, 0, 0, 1, 1, 1], [0], [0]>} : vector<8x8x8xbf16>, vector<8x16x8xbf16>, vector<8x8x16xf32> -> vector<8x8x16xf32>
    "tpu.trace_stop"() : () -> ()
    %cst_33 = arith.constant 0.353553385 : f32
    %150 = vector.broadcast %cst_33 : f32 to vector<8x8x16xf32>
    %151 = arith.mulf %149, %150 : vector<8x8x16xf32>
    %152 = vector.shape_cast %151 : vector<8x8x16xf32> to vector<4x2x8x16xf32>
    %153 = vector.shape_cast %146 : vector<2x8x16xf32> to vector<1x2x8x16xf32>
    %cst_34 = arith.constant 5.000000e-01 : f32
    %154 = vector.broadcast %cst_34 : f32 to vector<1x2x8x16xf32>
    %155 = arith.cmpf ogt, %153, %154 : vector<1x2x8x16xf32>
    %cst_35 = arith.constant -1.000000e+30 : f32
    %156 = vector.shape_cast %155 : vector<1x2x8x16xi1> to vector<1x2x8x16xi1>
    %157 = vector.broadcast %156 : vector<1x2x8x16xi1> to vector<4x2x8x16xi1>
    %158 = vector.broadcast %cst_35 : f32 to vector<4x2x8x16xf32>
    %159 = arith.select %157, %158, %152 : vector<4x2x8x16xi1>, vector<4x2x8x16xf32>
    %160 = vector.shape_cast %159 : vector<4x2x8x16xf32> to vector<8x8x16xf32>
    %cst_36 = arith.constant dense<0xFF800000> : vector<8x8xf32>
    %161 = vector.multi_reduction <maximumf>, %160, %cst_36 [2] : vector<8x8x16xf32> to vector<8x8xf32>
    %162 = vector.shape_cast %161 : vector<8x8xf32> to vector<8x8x1xf32>
    %163 = vector.broadcast %162 : vector<8x8x1xf32> to vector<8x8x16xf32>
    %164 = arith.subf %160, %163 : vector<8x8x16xf32>
    %165 = math.exp %164 : vector<8x8x16xf32>
    %cst_37 = arith.constant dense<0.000000e+00> : vector<8x8xf32>
    %166 = vector.multi_reduction <add>, %165, %cst_37 [2] : vector<8x8x16xf32> to vector<8x8xf32>
    %167 = vector.shape_cast %166 : vector<8x8xf32> to vector<8x8x1xf32>
    %168 = vector.broadcast %167 : vector<8x8x1xf32> to vector<8x8x16xf32>
    %169 = arith.divf %165, %168 : vector<8x8x16xf32>
    %c0_38 = arith.constant 0 : index
    %c0_39 = arith.constant 0 : index
    %c0_40 = arith.constant 0 : index
    %170 = vector.load %arg11[%c0_38, %c0_39, %c0_40] : memref<8x8x16xf32, #tpu.memory_space<vmem>>, vector<8x8x16xf32>
    tpu.vector_store %arg11[%c0_38, %c0_39, %c0_40], %169 {strides = array<i32>} : memref<8x8x16xf32, #tpu.memory_space<vmem>>, vector<8x8x16xf32>,
    %171 = arith.truncf %169 : vector<8x8x16xf32> to vector<8x8x16xbf16>
    %172 = arith.truncf %145 : vector<8x16x8xf32> to vector<8x16x8xbf16>
    "tpu.trace_start"() <{level = 10 : i32, message = "zqk,zkd->zqd"}> : () -> ()
    %cst_41 = arith.constant dense<0.000000e+00> : vector<8x8x8xf32>
    %173 = tpu.matmul %171, %172, %cst_41 {dimension_numbers = #tpu.dot_dimension_numbers<[2], [1], [1], [2], [0, 0, 0, 1, 1, 2], [0], [0]>} : vector<8x8x16xbf16>, vector<8x16x8xbf16>, vector<8x8x8xf32> -> vector<8x8x8xf32>
    "tpu.trace_stop"() : () -> ()
    %174 = vector.extract_strided_slice %173 {offsets = [0, 0, 0], sizes = [2, 8, 8], strides = [1, 1, 1]} : vector<8x8x8xf32> to vector<2x8x8xf32>
    %175 = vector.shape_cast %174 : vector<2x8x8xf32> to vector<16x8xf32>
    %176 = vector.extract_strided_slice %173 {offsets = [2, 0, 0], sizes = [2, 8, 8], strides = [1, 1, 1]} : vector<8x8x8xf32> to vector<2x8x8xf32>
    %177 = vector.shape_cast %176 : vector<2x8x8xf32> to vector<16x8xf32>
    %178 = vector.extract_strided_slice %173 {offsets = [4, 0, 0], sizes = [2, 8, 8], strides = [1, 1, 1]} : vector<8x8x8xf32> to vector<2x8x8xf32>
    %179 = vector.shape_cast %178 : vector<2x8x8xf32> to vector<16x8xf32>
    %180 = vector.extract_strided_slice %173 {offsets = [6, 0, 0], sizes = [2, 8, 8], strides = [1, 1, 1]} : vector<8x8x8xf32> to vector<2x8x8xf32>
    %181 = vector.shape_cast %180 : vector<2x8x8xf32> to vector<16x8xf32>
    %182 = tpu.concatenate %175, %177, %179, %181 in 1 : vector<16x8xf32>, vector<16x8xf32>, vector<16x8xf32>, vector<16x8xf32> -> vector<16x32xf32>
    %183 = arith.truncf %182 : vector<16x32xf32> to vector<16x32xbf16>
    %184 = vector.extract_strided_slice %5 {offsets = [0, 64], sizes = [32, 32], strides = [1, 1]} : vector<32x96xbf16> to vector<32x32xbf16>
    %cst_42 = arith.constant dense<0.000000e+00> : vector<16x32xf32>
    %185 = tpu.matmul %183, %184, %cst_42 {dimension_numbers = #tpu.dot_dimension_numbers<[1], [0], [0], [1], [0, 0, 1, 1], [], []>} : vector<16x32xbf16>, vector<32x32xbf16>, vector<16x32xf32> -> vector<16x32xf32>
    %186 = vector.extract_strided_slice %0 {offsets = [6, 0], sizes = [1, 32], strides = [1, 1]} : vector<16x128xf32> to vector<1x32xf32>
    %187 = vector.broadcast %186 : vector<1x32xf32> to vector<16x32xf32>
    %188 = arith.addf %185, %187 : vector<16x32xf32>
    %189 = arith.addf %188, %112 : vector<16x32xf32>
    %190 = vector.extract_strided_slice %0 {offsets = [7, 0], sizes = [1, 32], strides = [1, 1]} : vector<16x128xf32> to vector<1x32xf32>
    %191 = vector.extract_strided_slice %0 {offsets = [8, 0], sizes = [1, 32], strides = [1, 1]} : vector<16x128xf32> to vector<1x32xf32>
    %cst_43 = arith.constant dense<0.000000e+00> : vector<16xf32>
    %192 = vector.multi_reduction <add>, %189, %cst_43 [1] : vector<16x32xf32> to vector<16xf32>
    %193 = vector.shape_cast %192 : vector<16xf32> to vector<16x1xf32>
    %cst_44 = arith.constant 3.200000e+01 : f32
    %194 = vector.broadcast %cst_44 : f32 to vector<16x1xf32>
    %195 = arith.divf %193, %194 : vector<16x1xf32>
    %196 = vector.broadcast %195 : vector<16x1xf32> to vector<16x32xf32>
    %197 = arith.subf %189, %196 : vector<16x32xf32>
    %198 = arith.mulf %197, %197 : vector<16x32xf32>
    %cst_45 = arith.constant dense<0.000000e+00> : vector<16xf32>
    %199 = vector.multi_reduction <add>, %198, %cst_45 [1] : vector<16x32xf32> to vector<16xf32>
    %200 = vector.shape_cast %199 : vector<16xf32> to vector<16x1xf32>
    %cst_46 = arith.constant 3.200000e+01 : f32
    %201 = vector.broadcast %cst_46 : f32 to vector<16x1xf32>
    %202 = arith.divf %200, %201 : vector<16x1xf32>
    %203 = vector.broadcast %195 : vector<16x1xf32> to vector<16x32xf32>
    %204 = arith.subf %189, %203 : vector<16x32xf32>
    %cst_47 = arith.constant 9.99999974E-6 : f32
    %205 = vector.broadcast %cst_47 : f32 to vector<16x1xf32>
    %206 = arith.addf %202, %205 : vector<16x1xf32>
    %207 = math.rsqrt %206 : vector<16x1xf32>
    %208 = vector.broadcast %207 : vector<16x1xf32> to vector<16x32xf32>
    %209 = arith.mulf %204, %208 : vector<16x32xf32>
    %210 = vector.broadcast %190 : vector<1x32xf32> to vector<16x32xf32>
    %211 = arith.mulf %209, %210 : vector<16x32xf32>
    %212 = vector.broadcast %191 : vector<1x32xf32> to vector<16x32xf32>
    %213 = arith.addf %211, %212 : vector<16x32xf32>
    %214 = vector.broadcast %4 : vector<16x1xf32> to vector<16x32xf32>
    %215 = arith.mulf %213, %214 : vector<16x32xf32>
    %216 = arith.truncf %215 : vector<16x32xf32> to vector<16x32xbf16>
    %c0_48 = arith.constant 0 : index
    %c0_49 = arith.constant 0 : index
    %217 = vector.load %arg6[%c0_48, %c0_49] : memref<32x64xbf16, #tpu.memory_space<vmem>>, vector<32x64xbf16>
    %cst_50 = arith.constant dense<0.000000e+00> : vector<16x64xf32>
    %218 = tpu.matmul %216, %217, %cst_50 {dimension_numbers = #tpu.dot_dimension_numbers<[1], [0], [0], [1], [0, 0, 1, 1], [], []>} : vector<16x32xbf16>, vector<32x64xbf16>, vector<16x64xf32> -> vector<16x64xf32>
    %219 = vector.extract_strided_slice %0 {offsets = [9, 0], sizes = [1, 64], strides = [1, 1]} : vector<16x128xf32> to vector<1x64xf32>
    %220 = vector.broadcast %219 : vector<1x64xf32> to vector<16x64xf32>
    %221 = arith.addf %218, %220 : vector<16x64xf32>
    %cst_51 = arith.constant 0.000000e+00 : f32
    %222 = vector.broadcast %cst_51 : f32 to vector<16x64xf32>
    %223 = arith.maximumf %221, %222 : vector<16x64xf32>
    %224 = arith.truncf %223 : vector<16x64xf32> to vector<16x64xbf16>
    %c0_52 = arith.constant 0 : index
    %c0_53 = arith.constant 0 : index
    %225 = vector.load %arg7[%c0_52, %c0_53] : memref<64x32xbf16, #tpu.memory_space<vmem>>, vector<64x32xbf16>
    %cst_54 = arith.constant dense<0.000000e+00> : vector<16x32xf32>
    %226 = tpu.matmul %224, %225, %cst_54 {dimension_numbers = #tpu.dot_dimension_numbers<[1], [0], [0], [1], [0, 0, 1, 1], [], []>} : vector<16x64xbf16>, vector<64x32xbf16>, vector<16x32xf32> -> vector<16x32xf32>
    %227 = vector.extract_strided_slice %0 {offsets = [10, 0], sizes = [1, 32], strides = [1, 1]} : vector<16x128xf32> to vector<1x32xf32>
    %228 = vector.broadcast %227 : vector<1x32xf32> to vector<16x32xf32>
    %229 = arith.addf %226, %228 : vector<16x32xf32>
    %230 = arith.addf %229, %215 : vector<16x32xf32>
    %231 = vector.extract_strided_slice %0 {offsets = [11, 0], sizes = [1, 32], strides = [1, 1]} : vector<16x128xf32> to vector<1x32xf32>
    %232 = vector.extract_strided_slice %0 {offsets = [12, 0], sizes = [1, 32], strides = [1, 1]} : vector<16x128xf32> to vector<1x32xf32>
    %cst_55 = arith.constant dense<0.000000e+00> : vector<16xf32>
    %233 = vector.multi_reduction <add>, %230, %cst_55 [1] : vector<16x32xf32> to vector<16xf32>
    %234 = vector.shape_cast %233 : vector<16xf32> to vector<16x1xf32>
    %cst_56 = arith.constant 3.200000e+01 : f32
    %235 = vector.broadcast %cst_56 : f32 to vector<16x1xf32>
    %236 = arith.divf %234, %235 : vector<16x1xf32>
    %237 = vector.broadcast %236 : vector<16x1xf32> to vector<16x32xf32>
    %238 = arith.subf %230, %237 : vector<16x32xf32>
    %239 = arith.mulf %238, %238 : vector<16x32xf32>
    %cst_57 = arith.constant dense<0.000000e+00> : vector<16xf32>
    %240 = vector.multi_reduction <add>, %239, %cst_57 [1] : vector<16x32xf32> to vector<16xf32>
    %241 = vector.shape_cast %240 : vector<16xf32> to vector<16x1xf32>
    %cst_58 = arith.constant 3.200000e+01 : f32
    %242 = vector.broadcast %cst_58 : f32 to vector<16x1xf32>
    %243 = arith.divf %241, %242 : vector<16x1xf32>
    %244 = vector.broadcast %236 : vector<16x1xf32> to vector<16x32xf32>
    %245 = arith.subf %230, %244 : vector<16x32xf32>
    %cst_59 = arith.constant 9.99999974E-6 : f32
    %246 = vector.broadcast %cst_59 : f32 to vector<16x1xf32>
    %247 = arith.addf %243, %246 : vector<16x1xf32>
    %248 = math.rsqrt %247 : vector<16x1xf32>
    %249 = vector.broadcast %248 : vector<16x1xf32> to vector<16x32xf32>
    %250 = arith.mulf %245, %249 : vector<16x32xf32>
    %251 = vector.broadcast %231 : vector<1x32xf32> to vector<16x32xf32>
    %252 = arith.mulf %250, %251 : vector<16x32xf32>
    %253 = vector.broadcast %232 : vector<1x32xf32> to vector<16x32xf32>
    %254 = arith.addf %252, %253 : vector<16x32xf32>
    %255 = vector.broadcast %4 : vector<16x1xf32> to vector<16x32xf32>
    %256 = arith.mulf %254, %255 : vector<16x32xf32>
    %c0_60 = arith.constant 0 : index
    %c0_61 = arith.constant 0 : index
    %257 = vector.load %arg9[%c0_60, %c0_61] : memref<16x32xf32, #tpu.memory_space<vmem>>, vector<16x32xf32>
    tpu.vector_store %arg9[%c0_60, %c0_61], %256 {strides = array<i32>} : memref<16x32xf32, #tpu.memory_space<vmem>>, vector<16x32xf32>,
    return
  }
}

</mosaic_0001>

<llo_original>
// kernel: decoder_layer.1
$region0: #{decoder_layer.1}
  #allocation0 [shape = 'u32[]', space=smem, size = 0x4, offset = 0x4, fixed_abs, tag = 'smem constant byte address 0x4 - core index']
  #allocation1 [shape = 'u32[72,128]{1,0:T(1,128)}', space=vmem, size = 0x9000, scoped, tag = 'internal scratch']
  %s0 = inlined_call_operand.vmem [shape: bf16[48,32], index: 0, kind: input, shape index: {}]
  %s1 = inlined_call_operand.vmem [shape: f32[16,1], index: 1, kind: input, shape index: {}]
  %s2 = inlined_call_operand.vmem [shape: f32[2,8,8], index: 2, kind: input, shape index: {}]
  %s3 = inlined_call_operand.vmem [shape: f32[2,8,16], index: 3, kind: input, shape index: {}]
  %s4 = inlined_call_operand.vmem [shape: bf16[32,160], index: 4, kind: input, shape index: {}]
  %s5 = inlined_call_operand.vmem [shape: bf16[32,96], index: 5, kind: input, shape index: {}]
  %s6 = inlined_call_operand.vmem [shape: bf16[32,64], index: 6, kind: input, shape index: {}]
  %s7 = inlined_call_operand.vmem [shape: bf16[64,32], index: 7, kind: input, shape index: {}]
  %s8 = inlined_call_operand.vmem [shape: f32[16,128], index: 8, kind: input, shape index: {}]
  %s9 = inlined_call_operand.hbm [shape: f32[16,32], index: 9, kind: output, shape index: {0}]
  %s10 = inlined_call_operand.hbm [shape: f32[8,8,8], index: 10, kind: output, shape index: {1}]
  %s11 = inlined_call_operand.hbm [shape: f32[8,8,16], index: 11, kind: output, shape index: {2}]
  %12 = xla_tuple %s9, %s10, %s11
  %s13 = sld [smem:[#allocation0]]
  $region62: #{decoder_layer.1} parent=0
    _
  %s15 = ssub.s32 1, %s13
  %s16 = scalar_select 0, %s15, %s13
  $region1: #{decoder_layer.1} parent=0
    #allocation2 [shape = 'u8[8192]{0}', space=vmem, size = 0x2000, scoped, tag = 'output window, operand 0, single buffered']
    #allocation3 [shape = 's32[1]{0}', space=sflag, size = 0x4, scoped, tag = 'scoped memory for decoder_layer.1']
    #allocation4 [shape = 'u8[32768]{0}', space=vmem, size = 0x8000, scoped, tag = 'output window, operand 1, single buffered']
    #allocation5 [shape = 's32[1]{0}', space=sflag, size = 0x4, scoped, tag = 'scoped memory for decoder_layer.1']
    #allocation6 [shape = 'u8[32768]{0}', space=vmem, size = 0x8000, scoped, tag = 'output window, operand 2, single buffered']
    %17 = vsyncpa [#allocation3], 0
    %18 = vsyncpa [#allocation5], 0
    // Predicated region
    $region2: #{decoder_layer.1} parent=1 // pred_check
      _
    $region3: #{decoder_layer.1} parent=1 // pred_check_branch
      %20 = sbr.rel (0) target = $region5
    $region4: #{decoder_layer.1} parent=1 // pred_region
      _
    $region5: #{decoder_layer.1} parent=1 // pred_fallthru
      _
    // Predicated region
    $region6: #{decoder_layer.1} parent=1 // pred_check
      _
    $region7: #{decoder_layer.1} parent=1 // pred_check_branch
      %22 = sbr.rel (0) target = $region9
    $region8: #{decoder_layer.1} parent=1 // pred_region
      _
    $region9: #{decoder_layer.1} parent=1 // pred_fallthru
      _
    // Predicated region
    $region10: #{decoder_layer.1} parent=1 // pred_check
      _
    $region11: #{decoder_layer.1} parent=1 // pred_check_branch
      %24 = sbr.rel (0) target = $region13
    $region12: #{decoder_layer.1} parent=1 // pred_region
      _
    $region13: #{decoder_layer.1} parent=1 // pred_fallthru
      _
    // Predicated region
    $region14: #{decoder_layer.1} parent=1 // pred_check
      _
    $region15: #{decoder_layer.1} parent=1 // pred_check_branch
      %26 = sbr.rel (0) target = $region17
    $region16: #{decoder_layer.1} parent=1 // pred_region
      _
    $region17: #{decoder_layer.1} parent=1 // pred_fallthru
      _
    // Predicated region
    $region18: #{decoder_layer.1} parent=1 // pred_check
      _
    $region19: #{decoder_layer.1} parent=1 // pred_check_branch
      %28 = sbr.rel (0) target = $region21
    $region20: #{decoder_layer.1} parent=1 // pred_region
      _
    $region21: #{decoder_layer.1} parent=1 // pred_fallthru
      _
    // Predicated region
    $region22: #{decoder_layer.1} parent=1 // pred_check
      _
    $region23: #{decoder_layer.1} parent=1 // pred_check_branch
      %30 = sbr.rel (0) target = $region25
    $region24: #{decoder_layer.1} parent=1 // pred_region
      _
    $region25: #{decoder_layer.1} parent=1 // pred_fallthru
      _
    // Predicated region
    $region26: #{decoder_layer.1} parent=1 // pred_check
      _
    $region27: #{decoder_layer.1} parent=1 // pred_check_branch
      %32 = sbr.rel (0) target = $region29
    $region28: #{decoder_layer.1} parent=1 // pred_region
      _
    $region29: #{decoder_layer.1} parent=1 // pred_fallthru
      _
    // Predicated region
    $region30: #{decoder_layer.1} parent=1 // pred_check
      _
    $region31: #{decoder_layer.1} parent=1 // pred_check_branch
      %34 = sbr.rel (0) target = $region33
    $region32: #{decoder_layer.1} parent=1 // pred_region
      _
    $region33: #{decoder_layer.1} parent=1 // pred_fallthru
      _
    // Predicated region
    $region34: #{decoder_layer.1} parent=1 // pred_check
      _
    $region35: #{decoder_layer.1} parent=1 // pred_check_branch
      %36 = sbr.rel (0) target = $region37
    $region36: #{decoder_layer.1} parent=1 // pred_region
      _
    $region37: #{decoder_layer.1} parent=1 // pred_fallthru
      _
    %v38 = vld [vmem:[%s8] sm:$0xff]
    %v39 = vld [vmem:[%s8 + $0x8] sm:$0xff]
    %v40 = vld [vmem:[%s0] sm:$0xf]
    %v41 = vld [vmem:[%s0 + $0x4] sm:$0xf]
    %v42 = vld [vmem:[%s0 + $0x8] sm:$0xf]
    %v43 = vld [vmem:[%s0 + $0xc] sm:$0xf]
    %v44 = vld [vmem:[%s0 + $0x10] sm:$0xf]
    %v45 = vld [vmem:[%s0 + $0x14] sm:$0xf]
    %v46 = vunpack.c.l.bf16 %v40
    %v47 = vunpack.c.l.bf16 %v41
    %v48 = vld [vmem:[%s1] sm:$0xff]
    %v49 = vld [vmem:[%s1 + $0x8] sm:$0xff]
    %v50 = vld [vmem:[%s5] sm:$0xf]
    %v51 = vld [vmem:[%s5 + $0x4] sm:$0xf]
    %v52 = vld [vmem:[%s5 + $0x8] sm:$0xf]
    %v53 = vld [vmem:[%s5 + $0xc] sm:$0xf]
    %v54 = vld [vmem:[%s4] sm:$0xff]
    %v55 = vld [vmem:[%s4 + $0x8] sm:$0xff]
    %v56 = vld [vmem:[%s4 + $0x10] sm:$0xff]
    %v57 = vld [vmem:[%s4 + $0x18] sm:$0xff]
    %v64 = vunpack.c.l.b16 %v40
    %v65 = vunpack.c.l.b16 %v41
    %v66 = vunpack.c.l.b16 %v42
    %v67 = vunpack.c.l.b16 %v43
    %v68 = vunpack.c.l.b16 %v44
    %v69 = vunpack.c.l.b16 %v45
    %v70 = vpack.c.b16 %v65, %v64
    %v71 = vpack.c.b16 %v67, %v66
    %v72 = vpack.c.b16 %v69, %v68
    %v77 = vunpack.c.l.b16 %v54
    %v78 = vunpack.c.h.b16 %v54
    %v79 = vunpack.c.l.b16 %v55
    %v80 = vunpack.c.h.b16 %v55
    %v81 = vunpack.c.l.b16 %v56
    %v82 = vunpack.c.h.b16 %v56
    %v83 = vunpack.c.l.b16 %v57
    %v84 = vunpack.c.h.b16 %v57
    %v85 = vpack.c.b16 %v79, %v77
    %v86 = vpack.c.b16 %v80, %v78
    %v87 = vpack.c.b16 %v83, %v81
    %v88 = vpack.c.b16 %v84, %v82
    %vm93 = vcmask 261120
    %v95 = vsel %vm93, %v70, 0
    %v98 = vsel %vm93, %v71, 0
    %v101 = vsel %vm93, %v72, 0
    %103 = vmatpush.bf16.msra.mxu0 0
    %104 = vmatpush.bf16.msra.mxu0 0
    %105 = vmatpush.bf16.msra.mxu0 0
    %106 = vmatpush.bf16.msra.mxu0 0
    %107 = vmatpush.bf16.msra.mxu0 0
    %108 = vmatpush.bf16.msra.mxu0 0
    %109 = vmatpush.bf16.msra.mxu0 %v87
    %110 = vmatpush.bf16.msra.mxu0 %v85
    %111 = vmatmul.bf16.gmra.mxu0 %v95
    %v112 = vpop.f32.mrf.mxu0
    %v113 = vadd.f32 0.0, %v112
    %v114 = vpop.f32.mrf.mxu0
    %v115 = vadd.f32 0.0, %v114
    %116 = vmatmul.bf16.gmra.mxu0 %v98
    %v117 = vpop.f32.mrf.mxu0
    %v118 = vadd.f32 0.0, %v117
    %v119 = vpop.f32.mrf.mxu0
    %v120 = vadd.f32 0.0, %v119
    %121 = vmatmul.bf16.gmra.mxu0 %v101
    %v122 = vpop.f32.mrf.mxu0
    %v123 = vadd.f32 0.0, %v122
    %v124 = vpop.f32.mrf.mxu0
    %v125 = vadd.f32 0.0, %v124
    %126 = vdwg.mxu0
    %127 = vmatpush.bf16.msra.mxu0 0
    %128 = vmatpush.bf16.msra.mxu0 0
    %129 = vmatpush.bf16.msra.mxu0 0
    %130 = vmatpush.bf16.msra.mxu0 0
    %131 = vmatpush.bf16.msra.mxu0 0
    %132 = vmatpush.bf16.msra.mxu0 0
    %133 = vmatpush.bf16.msra.mxu0 %v88
    %134 = vmatpush.bf16.msra.mxu0 %v86
    %135 = vmatmul.bf16.gmra.mxu0 %v95
    %v136 = vpop.f32.mrf.mxu0
    %v137 = vpop.f32.mrf.mxu0
    %138 = vmatmul.bf16.gmra.mxu0 %v98
    %v139 = vpop.f32.mrf.mxu0
    %v140 = vadd.f32 0.0, %v139
    %v141 = vpop.f32.mrf.mxu0
    %v142 = vadd.f32 0.0, %v141
    %143 = vmatmul.bf16.gmra.mxu0 %v101
    %v144 = vpop.f32.mrf.mxu0
    %v145 = vadd.f32 0.0, %v144
    %v146 = vpop.f32.mrf.mxu0
    %v147 = vadd.f32 0.0, %v146
    %148 = vdwg.mxu0
    %v149 = vperm.slane %v38, 0
    %v150 = vadd.f32 %v113, %v149
    %v151 = vadd.f32 %v115, %v149
    %v152 = vperm.slane %v38, 2
    %154 = vrot.lane.b32.xlu0 %v152, 96
    %v155 = vpop.permute.xlu0 %154
    %v157 = vadd.f32 %v118, %v155
    %v158 = vadd.f32 %v140, %v155
    %v159 = vadd.f32 %v120, %v155
    %v160 = vadd.f32 %v142, %v155
    %v161 = vadd.f32 %v123, %v155
    %v162 = vadd.f32 %v145, %v155
    %v163 = vadd.f32 %v125, %v155
    %v164 = vadd.f32 %v147, %v155
    %167 = vrot.lane.b32.xlu0 %v150, 120
    %v168 = vpop.permute.xlu0 %167
    %169 = vrot.lane.b32.xlu0 %v151, 120
    %v170 = vpop.permute.xlu0 %169
    %173 = vrot.lane.b32.xlu0 %v150, 112
    %v174 = vpop.permute.xlu0 %173
    %175 = vrot.lane.b32.xlu0 %v151, 112
    %v176 = vpop.permute.xlu0 %175
    %179 = vrot.lane.b32.xlu0 %v150, 104
    %v180 = vpop.permute.xlu0 %179
    %181 = vrot.lane.b32.xlu0 %v151, 104
    %v182 = vpop.permute.xlu0 %181
    %v185 = vld [vmem:[%s2] sm:$0xff]
    %v186 = vld [vmem:[%s2 + $0x8] sm:$0xff]
    %v187 = vpack.c.bf16 %v150, %v150
    %v188 = vpack.c.bf16 %v151, %v151
    %v189 = vpack.c.bf16 %v168, %v168
    %v190 = vpack.c.bf16 %v170, %v170
    %v191 = vpack.c.bf16 %v174, %v174
    %v192 = vpack.c.bf16 %v176, %v176
    %v193 = vpack.c.bf16 %v180, %v180
    %v194 = vpack.c.bf16 %v182, %v182
    %v196 = vunpack.c.l.b16 %v187
    %v197 = vpack.c.b16 %v196, %v196
    %198 = vrot.lane.b32.xlu0 %v197, 96
    %v199 = vpop.permute.xlu0 %198
    %vm200 = vcmask 64512
    %v202 = vsel %vm200, %v187, 0
    %v205 = vsel %vm200, %v199, 0
    %207 = vmatpush.bf16.xpose.msra.mxu0 0
    %208 = vmatpush.bf16.xpose.msra.mxu0 0
    %209 = vmatpush.bf16.xpose.msra.mxu0 0
    %210 = vmatpush.bf16.xpose.msra.mxu0 0
    %211 = vmatpush.bf16.xpose.msra.mxu0 0
    %212 = vmatpush.bf16.xpose.msra.mxu0 0
    %213 = vmatpush.bf16.xpose.msra.mxu0 0
    %214 = vmatpush.bf16.xpose.msra.mxu0 %v205
    %215 = vmatmul.bf16.gmra.mxu0 %v202
    %v216 = vpop.f32.mrf.mxu0
    %v217 = vadd.f32 0.0, %v216
    %v218 = vpop.f32.mrf.mxu0
    %219 = vdwg.mxu0
    %v221 = vunpack.c.l.b16 %v188
    %v222 = vpack.c.b16 %v221, %v221
    %223 = vrot.lane.b32.xlu0 %v222, 96
    %v224 = vpop.permute.xlu0 %223
    %v226 = vsel %vm200, %v188, 0
    %v229 = vsel %vm200, %v224, 0
    %231 = vmatpush.bf16.xpose.msra.mxu0 0
    %232 = vmatpush.bf16.xpose.msra.mxu0 0
    %233 = vmatpush.bf16.xpose.msra.mxu0 0
    %234 = vmatpush.bf16.xpose.msra.mxu0 0
    %235 = vmatpush.bf16.xpose.msra.mxu0 0
    %236 = vmatpush.bf16.xpose.msra.mxu0 0
    %237 = vmatpush.bf16.xpose.msra.mxu0 0
    %238 = vmatpush.bf16.xpose.msra.mxu0 %v229
    %239 = vmatmul.bf16.gmra.mxu0 %v226
    %v240 = vpop.f32.mrf.mxu0
    %v241 = vadd.f32 0.0, %v240
    %v242 = vpop.f32.mrf.mxu0
    %243 = vdwg.mxu0
    %v245 = vunpack.c.l.b16 %v189
    %v246 = vpack.c.b16 %v245, %v245
    %247 = vrot.lane.b32.xlu0 %v246, 96
    %v248 = vpop.permute.xlu0 %247
    %v250 = vsel %vm200, %v189, 0
    %v253 = vsel %vm200, %v248, 0
    %255 = vmatpush.bf16.xpose.msra.mxu0 0
    %256 = vmatpush.bf16.xpose.msra.mxu0 0
    %257 = vmatpush.bf16.xpose.msra.mxu0 0
    %258 = vmatpush.bf16.xpose.msra.mxu0 0
    %259 = vmatpush.bf16.xpose.msra.mxu0 0
    %260 = vmatpush.bf16.xpose.msra.mxu0 0
    %261 = vmatpush.bf16.xpose.msra.mxu0 0
    %262 = vmatpush.bf16.xpose.msra.mxu0 %v253
    %263 = vmatmul.bf16.gmra.mxu0 %v250
    %v264 = vpop.f32.mrf.mxu0
    %v265 = vadd.f32 0.0, %v264
    %v266 = vpop.f32.mrf.mxu0
    %267 = vdwg.mxu0
    %v269 = vunpack.c.l.b16 %v190
    %v270 = vpack.c.b16 %v269, %v269
    %271 = vrot.lane.b32.xlu0 %v270, 96
    %v272 = vpop.permute.xlu0 %271
    %v274 = vsel %vm200, %v190, 0
    %v277 = vsel %vm200, %v272, 0
    %279 = vmatpush.bf16.xpose.msra.mxu0 0
    %280 = vmatpush.bf16.xpose.msra.mxu0 0
    %281 = vmatpush.bf16.xpose.msra.mxu0 0
    %282 = vmatpush.bf16.xpose.msra.mxu0 0
    %283 = vmatpush.bf16.xpose.msra.mxu0 0
    %284 = vmatpush.bf16.xpose.msra.mxu0 0
    %285 = vmatpush.bf16.xpose.msra.mxu0 0
    %286 = vmatpush.bf16.xpose.msra.mxu0 %v277
    %287 = vmatmul.bf16.gmra.mxu0 %v274
    %v288 = vpop.f32.mrf.mxu0
    %v289 = vadd.f32 0.0, %v288
    %v290 = vpop.f32.mrf.mxu0
    %291 = vdwg.mxu0
    %v293 = vunpack.c.l.b16 %v191
    %v294 = vpack.c.b16 %v293, %v293
    %295 = vrot.lane.b32.xlu0 %v294, 96
    %v296 = vpop.permute.xlu0 %295
    %v298 = vsel %vm200, %v191, 0
    %v301 = vsel %vm200, %v296, 0
    %303 = vmatpush.bf16.xpose.msra.mxu0 0
    %304 = vmatpush.bf16.xpose.msra.mxu0 0
    %305 = vmatpush.bf16.xpose.msra.mxu0 0
    %306 = vmatpush.bf16.xpose.msra.mxu0 0
    %307 = vmatpush.bf16.xpose.msra.mxu0 0
    %308 = vmatpush.bf16.xpose.msra.mxu0 0
    %309 = vmatpush.bf16.xpose.msra.mxu0 0
    %310 = vmatpush.bf16.xpose.msra.mxu0 %v301
    %311 = vmatmul.bf16.gmra.mxu0 %v298
    %v312 = vpop.f32.mrf.mxu0
    %v313 = vadd.f32 0.0, %v312
    %v314 = vpop.f32.mrf.mxu0
    %315 = vdwg.mxu0
    %v317 = vunpack.c.l.b16 %v192
    %v318 = vpack.c.b16 %v317, %v317
    %319 = vrot.lane.b32.xlu0 %v318, 96
    %v320 = vpop.permute.xlu0 %319
    %v322 = vsel %vm200, %v192, 0
    %v325 = vsel %vm200, %v320, 0
    %327 = vmatpush.bf16.xpose.msra.mxu0 0
    %328 = vmatpush.bf16.xpose.msra.mxu0 0
    %329 = vmatpush.bf16.xpose.msra.mxu0 0
    %330 = vmatpush.bf16.xpose.msra.mxu0 0
    %331 = vmatpush.bf16.xpose.msra.mxu0 0
    %332 = vmatpush.bf16.xpose.msra.mxu0 0
    %333 = vmatpush.bf16.xpose.msra.mxu0 0
    %334 = vmatpush.bf16.xpose.msra.mxu0 %v325
    %335 = vmatmul.bf16.gmra.mxu0 %v322
    %v336 = vpop.f32.mrf.mxu0
    %v337 = vadd.f32 0.0, %v336
    %v338 = vpop.f32.mrf.mxu0
    %339 = vdwg.mxu0
    %v341 = vunpack.c.l.b16 %v193
    %v342 = vpack.c.b16 %v341, %v341
    %343 = vrot.lane.b32.xlu0 %v342, 96
    %v344 = vpop.permute.xlu0 %343
    %v346 = vsel %vm200, %v193, 0
    %v349 = vsel %vm200, %v344, 0
    %351 = vmatpush.bf16.xpose.msra.mxu0 0
    %352 = vmatpush.bf16.xpose.msra.mxu0 0
    %353 = vmatpush.bf16.xpose.msra.mxu0 0
    %354 = vmatpush.bf16.xpose.msra.mxu0 0
    %355 = vmatpush.bf16.xpose.msra.mxu0 0
    %356 = vmatpush.bf16.xpose.msra.mxu0 0
    %357 = vmatpush.bf16.xpose.msra.mxu0 0
    %358 = vmatpush.bf16.xpose.msra.mxu0 %v349
    %359 = vmatmul.bf16.gmra.mxu0 %v346
    %v360 = vpop.f32.mrf.mxu0
    %v361 = vadd.f32 0.0, %v360
    %v362 = vpop.f32.mrf.mxu0
    %363 = vdwg.mxu0
    %v365 = vunpack.c.l.b16 %v194
    %v366 = vpack.c.b16 %v365, %v365
    %367 = vrot.lane.b32.xlu0 %v366, 96
    %v368 = vpop.permute.xlu0 %367
    %v370 = vsel %vm200, %v194, 0
    %v373 = vsel %vm200, %v368, 0
    %375 = vmatpush.bf16.xpose.msra.mxu0 0
    %376 = vmatpush.bf16.xpose.msra.mxu0 0
    %377 = vmatpush.bf16.xpose.msra.mxu0 0
    %378 = vmatpush.bf16.xpose.msra.mxu0 0
    %379 = vmatpush.bf16.xpose.msra.mxu0 0
    %380 = vmatpush.bf16.xpose.msra.mxu0 0
    %381 = vmatpush.bf16.xpose.msra.mxu0 0
    %382 = vmatpush.bf16.xpose.msra.mxu0 %v373
    %383 = vmatmul.bf16.gmra.mxu0 %v370
    %v384 = vpop.f32.mrf.mxu0
    %v385 = vadd.f32 0.0, %v384
    %v386 = vpop.f32.mrf.mxu0
    %387 = vdwg.mxu0
    %v388 = vmul.f32 %v217, 0.35355338
    %v389 = vmul.f32 %v241, 0.35355338
    %v390 = vmul.f32 %v265, 0.35355338
    %v391 = vmul.f32 %v289, 0.35355338
    %v392 = vmul.f32 %v313, 0.35355338
    %v393 = vmul.f32 %v337, 0.35355338
    %v394 = vmul.f32 %v361, 0.35355338
    %v395 = vmul.f32 %v385, 0.35355338
    %vm396 = vcmp.gt.f32.partialorder %v185, 0.5
    %vm397 = vcmp.gt.f32.partialorder %v186, 0.5
    %v398 = vsel %vm396, 1, 0
    %v399 = vsel %vm397, 1, 0
    %vm400 = vcmp.eq.s32.totalorder %v398, 1
    %vm401 = vcmp.eq.s32.totalorder %v399, 1
    %v402 = vsel %vm400, -1e+30, %v388
    %v403 = vsel %vm401, -1e+30, %v389
    %v404 = vsel %vm400, -1e+30, %v390
    %v405 = vsel %vm401, -1e+30, %v391
    %v406 = vsel %vm400, -1e+30, %v392
    %v407 = vsel %vm401, -1e+30, %v393
    %v408 = vsel %vm400, -1e+30, %v394
    %v409 = vsel %vm401, -1e+30, %v395
    %v410 = vsel %vm200, %v402, -inf
    %411 = vmax.xlane.f32.xlu0 %v410
    %v412 = vpop.xlane.xlu0 %411
    %v413 = vsel %vm200, %v403, -inf
    %414 = vmax.xlane.f32.xlu0 %v413
    %v415 = vpop.xlane.xlu0 %414
    %v416 = vsel %vm200, %v404, -inf
    %417 = vmax.xlane.f32.xlu0 %v416
    %v418 = vpop.xlane.xlu0 %417
    %v419 = vsel %vm200, %v405, -inf
    %420 = vmax.xlane.f32.xlu0 %v419
    %v421 = vpop.xlane.xlu0 %420
    %v422 = vsel %vm200, %v406, -inf
    %423 = vmax.xlane.f32.xlu0 %v422
    %v424 = vpop.xlane.xlu0 %423
    %v425 = vsel %vm200, %v407, -inf
    %426 = vmax.xlane.f32.xlu0 %v425
    %v427 = vpop.xlane.xlu0 %426
    %v428 = vsel %vm200, %v408, -inf
    %429 = vmax.xlane.f32.xlu0 %v428
    %v430 = vpop.xlane.xlu0 %429
    %v431 = vsel %vm200, %v409, -inf
    %432 = vmax.xlane.f32.xlu0 %v431
    %v433 = vpop.xlane.xlu0 %432
    %v434 = vsub.f32 %v402, %v412
    %v435 = vsub.f32 %v403, %v415
    %v436 = vsub.f32 %v404, %v418
    %v437 = vsub.f32 %v405, %v421
    %v438 = vsub.f32 %v406, %v424
    %v439 = vsub.f32 %v407, %v427
    %v440 = vsub.f32 %v408, %v430
    %v441 = vsub.f32 %v409, %v433
    %v442 = vmul.f32 %v434, 1.442695
    %v443 = vpow.pop %v442
    %v444 = vmul.f32 %v435, 1.442695
    %v445 = vpow.pop %v444
    %v446 = vmul.f32 %v436, 1.442695
    %v447 = vpow.pop %v446
    %v448 = vmul.f32 %v437, 1.442695
    %v449 = vpow.pop %v448
    %v450 = vmul.f32 %v438, 1.442695
    %v451 = vpow.pop %v450
    %v452 = vmul.f32 %v439, 1.442695
    %v453 = vpow.pop %v452
    %v454 = vmul.f32 %v440, 1.442695
    %v455 = vpow.pop %v454
    %v456 = vmul.f32 %v441, 1.442695
    %v457 = vpow.pop %v456
    %v458 = vsel %vm200, %v443, 0.0
    %459 = vadd.xlane.f32.xlu0 %v458
    %v460 = vpop.xlane.xlu0 %459
    %v461 = vsel %vm200, %v445, 0.0
    %462 = vadd.xlane.f32.xlu0 %v461
    %v463 = vpop.xlane.xlu0 %462
    %v464 = vsel %vm200, %v447, 0.0
    %465 = vadd.xlane.f32.xlu0 %v464
    %v466 = vpop.xlane.xlu0 %465
    %v467 = vsel %vm200, %v449, 0.0
    %468 = vadd.xlane.f32.xlu0 %v467
    %v469 = vpop.xlane.xlu0 %468
    %v470 = vsel %vm200, %v451, 0.0
    %471 = vadd.xlane.f32.xlu0 %v470
    %v472 = vpop.xlane.xlu0 %471
    %v473 = vsel %vm200, %v453, 0.0
    %474 = vadd.xlane.f32.xlu0 %v473
    %v475 = vpop.xlane.xlu0 %474
    %v476 = vsel %vm200, %v455, 0.0
    %477 = vadd.xlane.f32.xlu0 %v476
    %v478 = vpop.xlane.xlu0 %477
    %v479 = vsel %vm200, %v457, 0.0
    %480 = vadd.xlane.f32.xlu0 %v479
    %v481 = vpop.xlane.xlu0 %480
    %v482 = vrcp.pop %v460
    %v483 = vmul.f32 %v460, %v482
    %v484 = vsub.f32 1.0, %v483
    %v485 = vmul.f32 %v482, %v484
    %v486 = vadd.f32 %v482, %v485
    %vm487 = vweird.f32 %v460
    %vm488 = vweird.f32 %v482
    %vm489 = vmor %vm487, %vm488
    %v490 = vsel %vm489, %v482, %v486
    %v491 = vand.u32 2147483647, %v460
    %vm492 = vcmp.eq.f32.partialorder %v491, 8.507059e+37
    %v493 = vand.u32 %v460, 2147483648
    %v494 = vor.u32 1.1754944e-38, %v493
    %v495 = vsel %vm492, %v494, %v490
    %v496 = vmul.f32 %v443, %v495
    %v497 = vrcp.pop %v463
    %v498 = vmul.f32 %v463, %v497
    %v499 = vsub.f32 1.0, %v498
    %v500 = vmul.f32 %v497, %v499
    %v501 = vadd.f32 %v497, %v500
    %vm502 = vweird.f32 %v463
    %vm503 = vweird.f32 %v497
    %vm504 = vmor %vm502, %vm503
    %v505 = vsel %vm504, %v497, %v501
    %v506 = vand.u32 2147483647, %v463
    %vm507 = vcmp.eq.f32.partialorder %v506, 8.507059e+37
    %v508 = vand.u32 %v463, 2147483648
    %v509 = vor.u32 1.1754944e-38, %v508
    %v510 = vsel %vm507, %v509, %v505
    %v511 = vmul.f32 %v445, %v510
    %v512 = vrcp.pop %v466
    %v513 = vmul.f32 %v466, %v512
    %v514 = vsub.f32 1.0, %v513
    %v515 = vmul.f32 %v512, %v514
    %v516 = vadd.f32 %v512, %v515
    %vm517 = vweird.f32 %v466
    %vm518 = vweird.f32 %v512
    %vm519 = vmor %vm517, %vm518
    %v520 = vsel %vm519, %v512, %v516
    %v521 = vand.u32 2147483647, %v466
    %vm522 = vcmp.eq.f32.partialorder %v521, 8.507059e+37
    %v523 = vand.u32 %v466, 2147483648
    %v524 = vor.u32 1.1754944e-38, %v523
    %v525 = vsel %vm522, %v524, %v520
    %v526 = vmul.f32 %v447, %v525
    %v527 = vrcp.pop %v469
    %v528 = vmul.f32 %v469, %v527
    %v529 = vsub.f32 1.0, %v528
    %v530 = vmul.f32 %v527, %v529
    %v531 = vadd.f32 %v527, %v530
    %vm532 = vweird.f32 %v469
    %vm533 = vweird.f32 %v527
    %vm534 = vmor %vm532, %vm533
    %v535 = vsel %vm534, %v527, %v531
    %v536 = vand.u32 2147483647, %v469
    %vm537 = vcmp.eq.f32.partialorder %v536, 8.507059e+37
    %v538 = vand.u32 %v469, 2147483648
    %v539 = vor.u32 1.1754944e-38, %v538
    %v540 = vsel %vm537, %v539, %v535
    %v541 = vmul.f32 %v449, %v540
    %v542 = vrcp.pop %v472
    %v543 = vmul.f32 %v472, %v542
    %v544 = vsub.f32 1.0, %v543
    %v545 = vmul.f32 %v542, %v544
    %v546 = vadd.f32 %v542, %v545
    %vm547 = vweird.f32 %v472
    %vm548 = vweird.f32 %v542
    %vm549 = vmor %vm547, %vm548
    %v550 = vsel %vm549, %v542, %v546
    %v551 = vand.u32 2147483647, %v472
    %vm552 = vcmp.eq.f32.partialorder %v551, 8.507059e+37
    %v553 = vand.u32 %v472, 2147483648
    %v554 = vor.u32 1.1754944e-38, %v553
    %v555 = vsel %vm552, %v554, %v550
    %v556 = vmul.f32 %v451, %v555
    %v557 = vrcp.pop %v475
    %v558 = vmul.f32 %v475, %v557
    %v559 = vsub.f32 1.0, %v558
    %v560 = vmul.f32 %v557, %v559
    %v561 = vadd.f32 %v557, %v560
    %vm562 = vweird.f32 %v475
    %vm563 = vweird.f32 %v557
    %vm564 = vmor %vm562, %vm563
    %v565 = vsel %vm564, %v557, %v561
    %v566 = vand.u32 2147483647, %v475
    %vm567 = vcmp.eq.f32.partialorder %v566, 8.507059e+37
    %v568 = vand.u32 %v475, 2147483648
    %v569 = vor.u32 1.1754944e-38, %v568
    %v570 = vsel %vm567, %v569, %v565
    %v571 = vmul.f32 %v453, %v570
    %v572 = vrcp.pop %v478
    %v573 = vmul.f32 %v478, %v572
    %v574 = vsub.f32 1.0, %v573
    %v575 = vmul.f32 %v572, %v574
    %v576 = vadd.f32 %v572, %v575
    %vm577 = vweird.f32 %v478
    %vm578 = vweird.f32 %v572
    %vm579 = vmor %vm577, %vm578
    %v580 = vsel %vm579, %v572, %v576
    %v581 = vand.u32 2147483647, %v478
    %vm582 = vcmp.eq.f32.partialorder %v581, 8.507059e+37
    %v583 = vand.u32 %v478, 2147483648
    %v584 = vor.u32 1.1754944e-38, %v583
    %v585 = vsel %vm582, %v584, %v580
    %v586 = vmul.f32 %v455, %v585
    %v587 = vrcp.pop %v481
    %v588 = vmul.f32 %v481, %v587
    %v589 = vsub.f32 1.0, %v588
    %v590 = vmul.f32 %v587, %v589
    %v591 = vadd.f32 %v587, %v590
    %vm592 = vweird.f32 %v481
    %vm593 = vweird.f32 %v587
    %vm594 = vmor %vm592, %vm593
    %v595 = vsel %vm594, %v587, %v591
    %v596 = vand.u32 2147483647, %v481
    %vm597 = vcmp.eq.f32.partialorder %v596, 8.507059e+37
    %v598 = vand.u32 %v481, 2147483648
    %v599 = vor.u32 1.1754944e-38, %v598
    %v600 = vsel %vm597, %v599, %v595
    %v601 = vmul.f32 %v457, %v600
    %602 = vst.msk [vmem:[#allocation4] sm:$0xff] %vm200, %v496
    %603 = vst.msk [vmem:[#allocation4 + $0x8] sm:$0xff] %vm200, %v511
    %604 = vst.msk [vmem:[#allocation4 + $0x10] sm:$0xff] %vm200, %v526
    %605 = vst.msk [vmem:[#allocation4 + $0x18] sm:$0xff] %vm200, %v541
    %606 = vst.msk [vmem:[#allocation4 + $0x20] sm:$0xff] %vm200, %v556
    %607 = vst.msk [vmem:[#allocation4 + $0x28] sm:$0xff] %vm200, %v571
    %608 = vst.msk [vmem:[#allocation4 + $0x30] sm:$0xff] %vm200, %v586
    %609 = vst.msk [vmem:[#allocation4 + $0x38] sm:$0xff] %vm200, %v601
    %v610 = vpack.c.bf16 %v496, %v496
    %v611 = vpack.c.bf16 %v511, %v511
    %v612 = vpack.c.bf16 %v526, %v526
    %v613 = vpack.c.bf16 %v541, %v541
    %v614 = vpack.c.bf16 %v556, %v556
    %v615 = vpack.c.bf16 %v571, %v571
    %v616 = vpack.c.bf16 %v586, %v586
    %v617 = vpack.c.bf16 %v601, %v601
    %618 = vrot.lane.b32.xlu0 %v197, 64
    %v619 = vpop.permute.xlu0 %618
    %v621 = vsel %vm200, %v610, 0
    %vm623 = vcmask 1043456
    %v625 = vsel %vm623, %v619, 0
    %627 = vmatpush.bf16.msra.mxu0 0
    %628 = vmatpush.bf16.msra.mxu0 0
    %629 = vmatpush.bf16.msra.mxu0 0
    %630 = vmatpush.bf16.msra.mxu0 0
    %631 = vmatpush.bf16.msra.mxu0 0
    %632 = vmatpush.bf16.msra.mxu0 0
    %633 = vmatpush.bf16.msra.mxu0 0
    %634 = vmatpush.bf16.msra.mxu0 %v625
    %635 = vmatmul.bf16.gmra.mxu0 %v621
    %v636 = vpop.f32.mrf.mxu0
    %v637 = vadd.f32 0.0, %v636
    %v638 = vpop.f32.mrf.mxu0
    %639 = vdwg.mxu0
    %640 = vrot.lane.b32.xlu0 %v222, 64
    %v641 = vpop.permute.xlu0 %640
    %v643 = vsel %vm200, %v611, 0
    %v646 = vsel %vm623, %v641, 0
    %648 = vmatpush.bf16.msra.mxu0 0
    %649 = vmatpush.bf16.msra.mxu0 0
    %650 = vmatpush.bf16.msra.mxu0 0
    %651 = vmatpush.bf16.msra.mxu0 0
    %652 = vmatpush.bf16.msra.mxu0 0
    %653 = vmatpush.bf16.msra.mxu0 0
    %654 = vmatpush.bf16.msra.mxu0 0
    %655 = vmatpush.bf16.msra.mxu0 %v646
    %656 = vmatmul.bf16.gmra.mxu0 %v643
    %v657 = vpop.f32.mrf.mxu0
    %v658 = vadd.f32 0.0, %v657
    %v659 = vpop.f32.mrf.mxu0
    %660 = vdwg.mxu0
    %661 = vrot.lane.b32.xlu0 %v246, 64
    %v662 = vpop.permute.xlu0 %661
    %v664 = vsel %vm200, %v612, 0
    %v667 = vsel %vm623, %v662, 0
    %669 = vmatpush.bf16.msra.mxu0 0
    %670 = vmatpush.bf16.msra.mxu0 0
    %671 = vmatpush.bf16.msra.mxu0 0
    %672 = vmatpush.bf16.msra.mxu0 0
    %673 = vmatpush.bf16.msra.mxu0 0
    %674 = vmatpush.bf16.msra.mxu0 0
    %675 = vmatpush.bf16.msra.mxu0 0
    %676 = vmatpush.bf16.msra.mxu0 %v667
    %677 = vmatmul.bf16.gmra.mxu0 %v664
    %v678 = vpop.f32.mrf.mxu0
    %v679 = vadd.f32 0.0, %v678
    %v680 = vpop.f32.mrf.mxu0
    %681 = vdwg.mxu0
    %682 = vrot.lane.b32.xlu0 %v270, 64
    %v683 = vpop.permute.xlu0 %682
    %v685 = vsel %vm200, %v613, 0
    %v688 = vsel %vm623, %v683, 0
    %690 = vmatpush.bf16.msra.mxu0 0
    %691 = vmatpush.bf16.msra.mxu0 0
    %692 = vmatpush.bf16.msra.mxu0 0
    %693 = vmatpush.bf16.msra.mxu0 0
    %694 = vmatpush.bf16.msra.mxu0 0
    %695 = vmatpush.bf16.msra.mxu0 0
    %696 = vmatpush.bf16.msra.mxu0 0
    %697 = vmatpush.bf16.msra.mxu0 %v688
    %698 = vmatmul.bf16.gmra.mxu0 %v685
    %v699 = vpop.f32.mrf.mxu0
    %v700 = vadd.f32 0.0, %v699
    %v701 = vpop.f32.mrf.mxu0
    %702 = vdwg.mxu0
    %703 = vrot.lane.b32.xlu0 %v294, 64
    %v704 = vpop.permute.xlu0 %703
    %v706 = vsel %vm200, %v614, 0
    %v709 = vsel %vm623, %v704, 0
    %711 = vmatpush.bf16.msra.mxu0 0
    %712 = vmatpush.bf16.msra.mxu0 0
    %713 = vmatpush.bf16.msra.mxu0 0
    %714 = vmatpush.bf16.msra.mxu0 0
    %715 = vmatpush.bf16.msra.mxu0 0
    %716 = vmatpush.bf16.msra.mxu0 0
    %717 = vmatpush.bf16.msra.mxu0 0
    %718 = vmatpush.bf16.msra.mxu0 %v709
    %719 = vmatmul.bf16.gmra.mxu0 %v706
    %v720 = vpop.f32.mrf.mxu0
    %v721 = vadd.f32 0.0, %v720
    %v722 = vpop.f32.mrf.mxu0
    %723 = vdwg.mxu0
    %724 = vrot.lane.b32.xlu0 %v318, 64
    %v725 = vpop.permute.xlu0 %724
    %v727 = vsel %vm200, %v615, 0
    %v730 = vsel %vm623, %v725, 0
    %732 = vmatpush.bf16.msra.mxu0 0
    %733 = vmatpush.bf16.msra.mxu0 0
    %734 = vmatpush.bf16.msra.mxu0 0
    %735 = vmatpush.bf16.msra.mxu0 0
    %736 = vmatpush.bf16.msra.mxu0 0
    %737 = vmatpush.bf16.msra.mxu0 0
    %738 = vmatpush.bf16.msra.mxu0 0
    %739 = vmatpush.bf16.msra.mxu0 %v730
    %740 = vmatmul.bf16.gmra.mxu0 %v727
    %v741 = vpop.f32.mrf.mxu0
    %v742 = vadd.f32 0.0, %v741
    %v743 = vpop.f32.mrf.mxu0
    %744 = vdwg.mxu0
    %745 = vrot.lane.b32.xlu0 %v342, 64
    %v746 = vpop.permute.xlu0 %745
    %v748 = vsel %vm200, %v616, 0
    %v751 = vsel %vm623, %v746, 0
    %753 = vmatpush.bf16.msra.mxu0 0
    %754 = vmatpush.bf16.msra.mxu0 0
    %755 = vmatpush.bf16.msra.mxu0 0
    %756 = vmatpush.bf16.msra.mxu0 0
    %757 = vmatpush.bf16.msra.mxu0 0
    %758 = vmatpush.bf16.msra.mxu0 0
    %759 = vmatpush.bf16.msra.mxu0 0
    %760 = vmatpush.bf16.msra.mxu0 %v751
    %761 = vmatmul.bf16.gmra.mxu0 %v748
    %v762 = vpop.f32.mrf.mxu0
    %v763 = vadd.f32 0.0, %v762
    %v764 = vpop.f32.mrf.mxu0
    %765 = vdwg.mxu0
    %766 = vrot.lane.b32.xlu0 %v366, 64
    %v767 = vpop.permute.xlu0 %766
    %v769 = vsel %vm200, %v617, 0
    %v772 = vsel %vm623, %v767, 0
    %774 = vmatpush.bf16.msra.mxu0 0
    %775 = vmatpush.bf16.msra.mxu0 0
    %776 = vmatpush.bf16.msra.mxu0 0
    %777 = vmatpush.bf16.msra.mxu0 0
    %778 = vmatpush.bf16.msra.mxu0 0
    %779 = vmatpush.bf16.msra.mxu0 0
    %780 = vmatpush.bf16.msra.mxu0 0
    %781 = vmatpush.bf16.msra.mxu0 %v772
    %782 = vmatmul.bf16.gmra.mxu0 %v769
    %v783 = vpop.f32.mrf.mxu0
    %v784 = vadd.f32 0.0, %v783
    %v785 = vpop.f32.mrf.mxu0
    %786 = vdwg.mxu0
    %789 = vrot.lane.b32.xlu0 %v679, 8
    %v790 = vpop.permute.xlu0 %789
    %791 = vrot.lane.b32.xlu0 %v700, 8
    %v792 = vpop.permute.xlu0 %791
    %797 = vrot.lane.b32.xlu0 %v721, 16
    %v798 = vpop.permute.xlu0 %797
    %799 = vrot.lane.b32.xlu0 %v742, 16
    %v800 = vpop.permute.xlu0 %799
    %805 = vrot.lane.b32.xlu0 %v763, 24
    %v806 = vpop.permute.xlu0 %805
    %807 = vrot.lane.b32.xlu0 %v784, 24
    %v808 = vpop.permute.xlu0 %807
    %v811 = vsel %vm200, %v637, %v790
    %v812 = vsel %vm200, %v658, %v792
    %vm813 = vcmask 130048
    %v814 = vsel %vm813, %v811, %v798
    %v815 = vsel %vm813, %v812, %v800
    %vm816 = vcmask 195584
    %v817 = vsel %vm816, %v814, %v806
    %v818 = vsel %vm816, %v815, %v808
    %v819 = vpack.c.bf16 %v818, %v817
    %v820 = vperm.slane %v38, 3
    %v825 = vunpack.c.l.b16 %v50
    %v826 = vunpack.c.l.b16 %v51
    %v827 = vunpack.c.l.b16 %v52
    %v828 = vunpack.c.l.b16 %v53
    %v829 = vpack.c.b16 %v826, %v825
    %v830 = vpack.c.b16 %v828, %v827
    %831 = vrot.lane.b32.xlu0 %v829, 96
    %v832 = vpop.permute.xlu0 %831
    %833 = vrot.lane.b32.xlu0 %v830, 96
    %v834 = vpop.permute.xlu0 %833
    %v838 = vsel %vm93, %v819, 0
    %840 = vmatpush.bf16.msra.mxu0 0
    %841 = vmatpush.bf16.msra.mxu0 0
    %842 = vmatpush.bf16.msra.mxu0 0
    %843 = vmatpush.bf16.msra.mxu0 0
    %844 = vmatpush.bf16.msra.mxu0 0
    %845 = vmatpush.bf16.msra.mxu0 0
    %846 = vmatpush.bf16.msra.mxu0 %v834
    %847 = vmatpush.bf16.msra.mxu0 %v832
    %848 = vmatmul.bf16.gmra.mxu0 %v838
    %v849 = vpop.f32.mrf.mxu0
    %v850 = vadd.f32 %v820, %v849
    %v851 = vpop.f32.mrf.mxu0
    %v852 = vadd.f32 %v820, %v851
    %853 = vdwg.mxu0
    %v854 = vadd.f32 %v850, %v46
    %v855 = vadd.f32 %v852, %v47
    %v856 = vsel %vm93, %v854, 0.0
    %857 = vadd.xlane.f32.xlu0 %v856
    %v858 = vpop.xlane.xlu0 %857
    %v859 = vsel %vm93, %v855, 0.0
    %860 = vadd.xlane.f32.xlu0 %v859
    %v861 = vpop.xlane.xlu0 %860
    %v862 = vrcp.pop 32.0
    %v863 = vmul.f32 32.0, %v862
    %v864 = vsub.f32 1.0, %v863
    %v865 = vmul.f32 %v862, %v864
    %v866 = vadd.f32 %v862, %v865
    %vm867 = vweird.f32 %v862
    %v868 = vsel %vm867, %v862, %v866
    %v869 = vmul.f32 %v858, %v868
    %v870 = vmul.f32 %v861, %v868
    %v871 = vsub.f32 %v854, %v869
    %v872 = vsub.f32 %v855, %v870
    %v873 = vmul.f32 %v871, %v871
    %v874 = vmul.f32 %v872, %v872
    %v875 = vsel %vm93, %v873, 0.0
    %876 = vadd.xlane.f32.xlu0 %v875
    %v877 = vpop.xlane.xlu0 %876
    %v878 = vsel %vm93, %v874, 0.0
    %879 = vadd.xlane.f32.xlu0 %v878
    %v880 = vpop.xlane.xlu0 %879
    %v881 = vmul.f32 %v877, %v868
    %v882 = vmul.f32 %v880, %v868
    %v883 = vadd.f32 %v881, 1e-05
    %v884 = vadd.f32 %v882, 1e-05
    %v885 = vrsqrt.pop %v883
    %v886 = vmul.f32 %v885, %v883
    %v887 = vmul.f32 %v886, %v885
    %v888 = vmul.f32 0.5, %v887
    %v889 = vsub.f32 1.5, %v888
    %v890 = vmul.f32 %v885, %v889
    %vm891 = vweird.f32 %v883
    %vm892 = vweird.f32 %v885
    %vm893 = vmor %vm891, %vm892
    %v894 = vsel %vm893, %v885, %v890
    %v895 = vrsqrt.pop %v884
    %v896 = vmul.f32 %v895, %v884
    %v897 = vmul.f32 %v896, %v895
    %v898 = vmul.f32 0.5, %v897
    %v899 = vsub.f32 1.5, %v898
    %v900 = vmul.f32 %v895, %v899
    %vm901 = vweird.f32 %v884
    %vm902 = vweird.f32 %v895
    %vm903 = vmor %vm901, %vm902
    %v904 = vsel %vm903, %v895, %v900
    %v905 = vmul.f32 %v871, %v894
    %v906 = vmul.f32 %v872, %v904
    %v907 = vperm.slane %v38, 4
    %v908 = vmul.f32 %v905, %v907
    %v909 = vmul.f32 %v906, %v907
    %v910 = vperm.slane %v38, 5
    %v911 = vadd.f32 %v908, %v910
    %v912 = vadd.f32 %v909, %v910
    %914 = vset.pattern.permute.xlu0 0
    %915 = vperm.xlu0 %914, %v48
    %v916 = vpop.permute.xlu0 %915
    %919 = vset.pattern.permute.xlu0 0
    %920 = vperm.xlu0 %919, %v49
    %v921 = vpop.permute.xlu0 %920
    %v923 = vmul.f32 %v911, %v916
    %v924 = vmul.f32 %v912, %v921
    %v925 = vpack.c.bf16 %v924, %v923
    %v926 = vperm.slane %v38, 1
    %v930 = vsel %vm93, %v925, 0
    %932 = vmatpush.bf16.msra.mxu0 0
    %933 = vmatpush.bf16.msra.mxu0 0
    %934 = vmatpush.bf16.msra.mxu0 0
    %935 = vmatpush.bf16.msra.mxu0 0
    %936 = vmatpush.bf16.msra.mxu0 0
    %937 = vmatpush.bf16.msra.mxu0 0
    %938 = vmatpush.bf16.msra.mxu0 %v830
    %939 = vmatpush.bf16.msra.mxu0 %v829
    %940 = vmatmul.bf16.gmra.mxu0 %v930
    %v941 = vpop.f32.mrf.mxu0
    %v942 = vadd.f32 %v926, %v941
    %v943 = vpop.f32.mrf.mxu0
    %v944 = vadd.f32 %v926, %v943
    %945 = vdwg.mxu0
    %948 = vrot.lane.b32.xlu0 %v942, 120
    %v949 = vpop.permute.xlu0 %948
    %950 = vrot.lane.b32.xlu0 %v944, 120
    %v951 = vpop.permute.xlu0 %950
    %954 = vrot.lane.b32.xlu0 %v942, 112
    %v955 = vpop.permute.xlu0 %954
    %956 = vrot.lane.b32.xlu0 %v944, 112
    %v957 = vpop.permute.xlu0 %956
    %960 = vrot.lane.b32.xlu0 %v942, 104
    %v961 = vpop.permute.xlu0 %960
    %962 = vrot.lane.b32.xlu0 %v944, 104
    %v963 = vpop.permute.xlu0 %962
    %970 = vrot.lane.b32.xlu0 %v157, 120
    %v971 = vpop.permute.xlu0 %970
    %972 = vrot.lane.b32.xlu0 %v159, 120
    %v973 = vpop.permute.xlu0 %972
    %974 = vrot.lane.b32.xlu0 %v161, 120
    %v975 = vpop.permute.xlu0 %974
    %976 = vrot.lane.b32.xlu0 %v163, 120
    %v977 = vpop.permute.xlu0 %976
    %982 = vrot.lane.b32.xlu0 %v157, 112
    %v983 = vpop.permute.xlu0 %982
    %984 = vrot.lane.b32.xlu0 %v159, 112
    %v985 = vpop.permute.xlu0 %984
    %986 = vrot.lane.b32.xlu0 %v161, 112
    %v987 = vpop.permute.xlu0 %986
    %988 = vrot.lane.b32.xlu0 %v163, 112
    %v989 = vpop.permute.xlu0 %988
    %994 = vrot.lane.b32.xlu0 %v157, 104
    %v995 = vpop.permute.xlu0 %994
    %996 = vrot.lane.b32.xlu0 %v159, 104
    %v997 = vpop.permute.xlu0 %996
    %998 = vrot.lane.b32.xlu0 %v161, 104
    %v999 = vpop.permute.xlu0 %998
    %1000 = vrot.lane.b32.xlu0 %v163, 104
    %v1001 = vpop.permute.xlu0 %1000
    %1010 = vrot.lane.b32.xlu0 %v158, 120
    %v1011 = vpop.permute.xlu0 %1010
    %1012 = vrot.lane.b32.xlu0 %v160, 120
    %v1013 = vpop.permute.xlu0 %1012
    %1014 = vrot.lane.b32.xlu0 %v162, 120
    %v1015 = vpop.permute.xlu0 %1014
    %1016 = vrot.lane.b32.xlu0 %v164, 120
    %v1017 = vpop.permute.xlu0 %1016
    %1022 = vrot.lane.b32.xlu0 %v158, 112
    %v1023 = vpop.permute.xlu0 %1022
    %1024 = vrot.lane.b32.xlu0 %v160, 112
    %v1025 = vpop.permute.xlu0 %1024
    %1026 = vrot.lane.b32.xlu0 %v162, 112
    %v1027 = vpop.permute.xlu0 %1026
    %1028 = vrot.lane.b32.xlu0 %v164, 112
    %v1029 = vpop.permute.xlu0 %1028
    %1034 = vrot.lane.b32.xlu0 %v158, 104
    %v1035 = vpop.permute.xlu0 %1034
    %1036 = vrot.lane.b32.xlu0 %v160, 104
    %v1037 = vpop.permute.xlu0 %1036
    %1038 = vrot.lane.b32.xlu0 %v162, 104
    %v1039 = vpop.permute.xlu0 %1038
    %1040 = vrot.lane.b32.xlu0 %v164, 104
    %v1041 = vpop.permute.xlu0 %1040
    %v1046 = vld [vmem:[%s3] sm:$0xff]
    %v1047 = vld [vmem:[%s3 + $0x8] sm:$0xff]
    %v1048 = vpack.c.bf16 %v942, %v942
    %v1049 = vpack.c.bf16 %v944, %v944
    %v1050 = vpack.c.bf16 %v949, %v949
    %v1051 = vpack.c.bf16 %v951, %v951
    %v1052 = vpack.c.bf16 %v955, %v955
    %v1053 = vpack.c.bf16 %v957, %v957
    %v1054 = vpack.c.bf16 %v961, %v961
    %v1055 = vpack.c.bf16 %v963, %v963
    %v1056 = vpack.c.bf16 %v157, %v157
    %v1057 = vpack.c.bf16 %v159, %v159
    %v1058 = vpack.c.bf16 %v161, %v161
    %v1059 = vpack.c.bf16 %v163, %v163
    %v1060 = vpack.c.bf16 %v971, %v971
    %v1061 = vpack.c.bf16 %v973, %v973
    %v1062 = vpack.c.bf16 %v975, %v975
    %v1063 = vpack.c.bf16 %v977, %v977
    %v1064 = vpack.c.bf16 %v983, %v983
    %v1065 = vpack.c.bf16 %v985, %v985
    %v1066 = vpack.c.bf16 %v987, %v987
    %v1067 = vpack.c.bf16 %v989, %v989
    %v1068 = vpack.c.bf16 %v995, %v995
    %v1069 = vpack.c.bf16 %v997, %v997
    %v1070 = vpack.c.bf16 %v999, %v999
    %v1071 = vpack.c.bf16 %v1001, %v1001
    %v1074 = vunpack.c.l.b16 %v1056
    %v1075 = vunpack.c.l.b16 %v1057
    %v1076 = vpack.c.b16 %v1075, %v1074
    %1077 = vrot.lane.b32.xlu0 %v1076, 32
    %v1078 = vpop.permute.xlu0 %1077
    %v1080 = vsel %vm200, %v1048, 0
    %v1083 = vsel %vm200, %v1078, 0
    %1085 = vmatpush.bf16.xpose.msra.mxu0 0
    %1086 = vmatpush.bf16.xpose.msra.mxu0 0
    %1087 = vmatpush.bf16.xpose.msra.mxu0 0
    %1088 = vmatpush.bf16.xpose.msra.mxu0 0
    %1089 = vmatpush.bf16.xpose.msra.mxu0 0
    %1090 = vmatpush.bf16.xpose.msra.mxu0 0
    %1091 = vmatpush.bf16.xpose.msra.mxu0 0
    %1092 = vmatpush.bf16.xpose.msra.mxu0 %v1083
    %1093 = vmatmul.bf16.gmra.mxu0 %v1080
    %v1094 = vpop.f32.mrf.mxu0
    %v1095 = vadd.f32 0.0, %v1094
    %v1096 = vpop.f32.mrf.mxu0
    %1097 = vdwg.mxu0
    %v1100 = vunpack.c.l.b16 %v1058
    %v1101 = vunpack.c.l.b16 %v1059
    %v1102 = vpack.c.b16 %v1101, %v1100
    %1103 = vrot.lane.b32.xlu0 %v1102, 32
    %v1104 = vpop.permute.xlu0 %1103
    %v1106 = vsel %vm200, %v1049, 0
    %v1109 = vsel %vm200, %v1104, 0
    %1111 = vmatpush.bf16.xpose.msra.mxu0 0
    %1112 = vmatpush.bf16.xpose.msra.mxu0 0
    %1113 = vmatpush.bf16.xpose.msra.mxu0 0
    %1114 = vmatpush.bf16.xpose.msra.mxu0 0
    %1115 = vmatpush.bf16.xpose.msra.mxu0 0
    %1116 = vmatpush.bf16.xpose.msra.mxu0 0
    %1117 = vmatpush.bf16.xpose.msra.mxu0 0
    %1118 = vmatpush.bf16.xpose.msra.mxu0 %v1109
    %1119 = vmatmul.bf16.gmra.mxu0 %v1106
    %v1120 = vpop.f32.mrf.mxu0
    %v1121 = vadd.f32 0.0, %v1120
    %v1122 = vpop.f32.mrf.mxu0
    %1123 = vdwg.mxu0
    %v1126 = vunpack.c.l.b16 %v1060
    %v1127 = vunpack.c.l.b16 %v1061
    %v1128 = vpack.c.b16 %v1127, %v1126
    %1129 = vrot.lane.b32.xlu0 %v1128, 32
    %v1130 = vpop.permute.xlu0 %1129
    %v1132 = vsel %vm200, %v1050, 0
    %v1135 = vsel %vm200, %v1130, 0
    %1137 = vmatpush.bf16.xpose.msra.mxu0 0
    %1138 = vmatpush.bf16.xpose.msra.mxu0 0
    %1139 = vmatpush.bf16.xpose.msra.mxu0 0
    %1140 = vmatpush.bf16.xpose.msra.mxu0 0
    %1141 = vmatpush.bf16.xpose.msra.mxu0 0
    %1142 = vmatpush.bf16.xpose.msra.mxu0 0
    %1143 = vmatpush.bf16.xpose.msra.mxu0 0
    %1144 = vmatpush.bf16.xpose.msra.mxu0 %v1135
    %1145 = vmatmul.bf16.gmra.mxu0 %v1132
    %v1146 = vpop.f32.mrf.mxu0
    %v1147 = vadd.f32 0.0, %v1146
    %v1148 = vpop.f32.mrf.mxu0
    %1149 = vdwg.mxu0
    %v1152 = vunpack.c.l.b16 %v1062
    %v1153 = vunpack.c.l.b16 %v1063
    %v1154 = vpack.c.b16 %v1153, %v1152
    %1155 = vrot.lane.b32.xlu0 %v1154, 32
    %v1156 = vpop.permute.xlu0 %1155
    %v1158 = vsel %vm200, %v1051, 0
    %v1161 = vsel %vm200, %v1156, 0
    %1163 = vmatpush.bf16.xpose.msra.mxu0 0
    %1164 = vmatpush.bf16.xpose.msra.mxu0 0
    %1165 = vmatpush.bf16.xpose.msra.mxu0 0
    %1166 = vmatpush.bf16.xpose.msra.mxu0 0
    %1167 = vmatpush.bf16.xpose.msra.mxu0 0
    %1168 = vmatpush.bf16.xpose.msra.mxu0 0
    %1169 = vmatpush.bf16.xpose.msra.mxu0 0
    %1170 = vmatpush.bf16.xpose.msra.mxu0 %v1161
    %1171 = vmatmul.bf16.gmra.mxu0 %v1158
    %v1172 = vpop.f32.mrf.mxu0
    %v1173 = vadd.f32 0.0, %v1172
    %v1174 = vpop.f32.mrf.mxu0
    %1175 = vdwg.mxu0
    %v1178 = vunpack.c.l.b16 %v1064
    %v1179 = vunpack.c.l.b16 %v1065
    %v1180 = vpack.c.b16 %v1179, %v1178
    %1181 = vrot.lane.b32.xlu0 %v1180, 32
    %v1182 = vpop.permute.xlu0 %1181
    %v1184 = vsel %vm200, %v1052, 0
    %v1187 = vsel %vm200, %v1182, 0
    %1189 = vmatpush.bf16.xpose.msra.mxu0 0
    %1190 = vmatpush.bf16.xpose.msra.mxu0 0
    %1191 = vmatpush.bf16.xpose.msra.mxu0 0
    %1192 = vmatpush.bf16.xpose.msra.mxu0 0
    %1193 = vmatpush.bf16.xpose.msra.mxu0 0
    %1194 = vmatpush.bf16.xpose.msra.mxu0 0
    %1195 = vmatpush.bf16.xpose.msra.mxu0 0
    %1196 = vmatpush.bf16.xpose.msra.mxu0 %v1187
    %1197 = vmatmul.bf16.gmra.mxu0 %v1184
    %v1198 = vpop.f32.mrf.mxu0
    %v1199 = vadd.f32 0.0, %v1198
    %v1200 = vpop.f32.mrf.mxu0
    %1201 = vdwg.mxu0
    %v1204 = vunpack.c.l.b16 %v1066
    %v1205 = vunpack.c.l.b16 %v1067
    %v1206 = vpack.c.b16 %v1205, %v1204
    %1207 = vrot.lane.b32.xlu0 %v1206, 32
    %v1208 = vpop.permute.xlu0 %1207
    %v1210 = vsel %vm200, %v1053, 0
    %v1213 = vsel %vm200, %v1208, 0
    %1215 = vmatpush.bf16.xpose.msra.mxu0 0
    %1216 = vmatpush.bf16.xpose.msra.mxu0 0
    %1217 = vmatpush.bf16.xpose.msra.mxu0 0
    %1218 = vmatpush.bf16.xpose.msra.mxu0 0
    %1219 = vmatpush.bf16.xpose.msra.mxu0 0
    %1220 = vmatpush.bf16.xpose.msra.mxu0 0
    %1221 = vmatpush.bf16.xpose.msra.mxu0 0
    %1222 = vmatpush.bf16.xpose.msra.mxu0 %v1213
    %1223 = vmatmul.bf16.gmra.mxu0 %v1210
    %v1224 = vpop.f32.mrf.mxu0
    %v1225 = vadd.f32 0.0, %v1224
    %v1226 = vpop.f32.mrf.mxu0
    %1227 = vdwg.mxu0
    %v1230 = vunpack.c.l.b16 %v1068
    %v1231 = vunpack.c.l.b16 %v1069
    %v1232 = vpack.c.b16 %v1231, %v1230
    %1233 = vrot.lane.b32.xlu0 %v1232, 32
    %v1234 = vpop.permute.xlu0 %1233
    %v1236 = vsel %vm200, %v1054, 0
    %v1239 = vsel %vm200, %v1234, 0
    %1241 = vmatpush.bf16.xpose.msra.mxu0 0
    %1242 = vmatpush.bf16.xpose.msra.mxu0 0
    %1243 = vmatpush.bf16.xpose.msra.mxu0 0
    %1244 = vmatpush.bf16.xpose.msra.mxu0 0
    %1245 = vmatpush.bf16.xpose.msra.mxu0 0
    %1246 = vmatpush.bf16.xpose.msra.mxu0 0
    %1247 = vmatpush.bf16.xpose.msra.mxu0 0
    %1248 = vmatpush.bf16.xpose.msra.mxu0 %v1239
    %1249 = vmatmul.bf16.gmra.mxu0 %v1236
    %v1250 = vpop.f32.mrf.mxu0
    %v1251 = vadd.f32 0.0, %v1250
    %v1252 = vpop.f32.mrf.mxu0
    %1253 = vdwg.mxu0
    %v1256 = vunpack.c.l.b16 %v1070
    %v1257 = vunpack.c.l.b16 %v1071
    %v1258 = vpack.c.b16 %v1257, %v1256
    %1259 = vrot.lane.b32.xlu0 %v1258, 32
    %v1260 = vpop.permute.xlu0 %1259
    %v1262 = vsel %vm200, %v1055, 0
    %v1265 = vsel %vm200, %v1260, 0
    %1267 = vmatpush.bf16.xpose.msra.mxu0 0
    %1268 = vmatpush.bf16.xpose.msra.mxu0 0
    %1269 = vmatpush.bf16.xpose.msra.mxu0 0
    %1270 = vmatpush.bf16.xpose.msra.mxu0 0
    %1271 = vmatpush.bf16.xpose.msra.mxu0 0
    %1272 = vmatpush.bf16.xpose.msra.mxu0 0
    %1273 = vmatpush.bf16.xpose.msra.mxu0 0
    %1274 = vmatpush.bf16.xpose.msra.mxu0 %v1265
    %1275 = vmatmul.bf16.gmra.mxu0 %v1262
    %v1276 = vpop.f32.mrf.mxu0
    %v1277 = vadd.f32 0.0, %v1276
    %v1278 = vpop.f32.mrf.mxu0
    %1279 = vdwg.mxu0
    %v1280 = vmul.f32 %v1095, 0.35355338
    %v1281 = vmul.f32 %v1121, 0.35355338
    %v1282 = vmul.f32 %v1147, 0.35355338
    %v1283 = vmul.f32 %v1173, 0.35355338
    %v1284 = vmul.f32 %v1199, 0.35355338
    %v1285 = vmul.f32 %v1225, 0.35355338
    %v1286 = vmul.f32 %v1251, 0.35355338
    %v1287 = vmul.f32 %v1277, 0.35355338
    %vm1288 = vcmp.gt.f32.partialorder %v1046, 0.5
    %vm1289 = vcmp.gt.f32.partialorder %v1047, 0.5
    %v1290 = vsel %vm1288, 1, 0
    %v1291 = vsel %vm1289, 1, 0
    %vm1292 = vcmp.eq.s32.totalorder %v1290, 1
    %vm1293 = vcmp.eq.s32.totalorder %v1291, 1
    %v1294 = vsel %vm1292, -1e+30, %v1280
    %v1295 = vsel %vm1293, -1e+30, %v1281
    %v1296 = vsel %vm1292, -1e+30, %v1282
    %v1297 = vsel %vm1293, -1e+30, %v1283
    %v1298 = vsel %vm1292, -1e+30, %v1284
    %v1299 = vsel %vm1293, -1e+30, %v1285
    %v1300 = vsel %vm1292, -1e+30, %v1286
    %v1301 = vsel %vm1293, -1e+30, %v1287
    %v1302 = vsel %vm813, %v1294, -inf
    %1303 = vmax.xlane.f32.xlu0 %v1302
    %v1304 = vpop.xlane.xlu0 %1303
    %v1305 = vsel %vm813, %v1295, -inf
    %1306 = vmax.xlane.f32.xlu0 %v1305
    %v1307 = vpop.xlane.xlu0 %1306
    %v1308 = vsel %vm813, %v1296, -inf
    %1309 = vmax.xlane.f32.xlu0 %v1308
    %v1310 = vpop.xlane.xlu0 %1309
    %v1311 = vsel %vm813, %v1297, -inf
    %1312 = vmax.xlane.f32.xlu0 %v1311
    %v1313 = vpop.xlane.xlu0 %1312
    %v1314 = vsel %vm813, %v1298, -inf
    %1315 = vmax.xlane.f32.xlu0 %v1314
    %v1316 = vpop.xlane.xlu0 %1315
    %v1317 = vsel %vm813, %v1299, -inf
    %1318 = vmax.xlane.f32.xlu0 %v1317
    %v1319 = vpop.xlane.xlu0 %1318
    %v1320 = vsel %vm813, %v1300, -inf
    %1321 = vmax.xlane.f32.xlu0 %v1320
    %v1322 = vpop.xlane.xlu0 %1321
    %v1323 = vsel %vm813, %v1301, -inf
    %1324 = vmax.xlane.f32.xlu0 %v1323
    %v1325 = vpop.xlane.xlu0 %1324
    %v1326 = vsub.f32 %v1294, %v1304
    %v1327 = vsub.f32 %v1295, %v1307
    %v1328 = vsub.f32 %v1296, %v1310
    %v1329 = vsub.f32 %v1297, %v1313
    %v1330 = vsub.f32 %v1298, %v1316
    %v1331 = vsub.f32 %v1299, %v1319
    %v1332 = vsub.f32 %v1300, %v1322
    %v1333 = vsub.f32 %v1301, %v1325
    %v1334 = vmul.f32 %v1326, 1.442695
    %v1335 = vpow.pop %v1334
    %v1336 = vmul.f32 %v1327, 1.442695
    %v1337 = vpow.pop %v1336
    %v1338 = vmul.f32 %v1328, 1.442695
    %v1339 = vpow.pop %v1338
    %v1340 = vmul.f32 %v1329, 1.442695
    %v1341 = vpow.pop %v1340
    %v1342 = vmul.f32 %v1330, 1.442695
    %v1343 = vpow.pop %v1342
    %v1344 = vmul.f32 %v1331, 1.442695
    %v1345 = vpow.pop %v1344
    %v1346 = vmul.f32 %v1332, 1.442695
    %v1347 = vpow.pop %v1346
    %v1348 = vmul.f32 %v1333, 1.442695
    %v1349 = vpow.pop %v1348
    %v1350 = vsel %vm813, %v1335, 0.0
    %1351 = vadd.xlane.f32.xlu0 %v1350
    %v1352 = vpop.xlane.xlu0 %1351
    %v1353 = vsel %vm813, %v1337, 0.0
    %1354 = vadd.xlane.f32.xlu0 %v1353
    %v1355 = vpop.xlane.xlu0 %1354
    %v1356 = vsel %vm813, %v1339, 0.0
    %1357 = vadd.xlane.f32.xlu0 %v1356
    %v1358 = vpop.xlane.xlu0 %1357
    %v1359 = vsel %vm813, %v1341, 0.0
    %1360 = vadd.xlane.f32.xlu0 %v1359
    %v1361 = vpop.xlane.xlu0 %1360
    %v1362 = vsel %vm813, %v1343, 0.0
    %1363 = vadd.xlane.f32.xlu0 %v1362
    %v1364 = vpop.xlane.xlu0 %1363
    %v1365 = vsel %vm813, %v1345, 0.0
    %1366 = vadd.xlane.f32.xlu0 %v1365
    %v1367 = vpop.xlane.xlu0 %1366
    %v1368 = vsel %vm813, %v1347, 0.0
    %1369 = vadd.xlane.f32.xlu0 %v1368
    %v1370 = vpop.xlane.xlu0 %1369
    %v1371 = vsel %vm813, %v1349, 0.0
    %1372 = vadd.xlane.f32.xlu0 %v1371
    %v1373 = vpop.xlane.xlu0 %1372
    %v1374 = vrcp.pop %v1352
    %v1375 = vmul.f32 %v1352, %v1374
    %v1376 = vsub.f32 1.0, %v1375
    %v1377 = vmul.f32 %v1374, %v1376
    %v1378 = vadd.f32 %v1374, %v1377
    %vm1379 = vweird.f32 %v1352
    %vm1380 = vweird.f32 %v1374
    %vm1381 = vmor %vm1379, %vm1380
    %v1382 = vsel %vm1381, %v1374, %v1378
    %v1383 = vand.u32 2147483647, %v1352
    %vm1384 = vcmp.eq.f32.partialorder %v1383, 8.507059e+37
    %v1385 = vand.u32 %v1352, 2147483648
    %v1386 = vor.u32 1.1754944e-38, %v1385
    %v1387 = vsel %vm1384, %v1386, %v1382
    %v1388 = vmul.f32 %v1335, %v1387
    %v1389 = vrcp.pop %v1355
    %v1390 = vmul.f32 %v1355, %v1389
    %v1391 = vsub.f32 1.0, %v1390
    %v1392 = vmul.f32 %v1389, %v1391
    %v1393 = vadd.f32 %v1389, %v1392
    %vm1394 = vweird.f32 %v1355
    %vm1395 = vweird.f32 %v1389
    %vm1396 = vmor %vm1394, %vm1395
    %v1397 = vsel %vm1396, %v1389, %v1393
    %v1398 = vand.u32 2147483647, %v1355
    %vm1399 = vcmp.eq.f32.partialorder %v1398, 8.507059e+37
    %v1400 = vand.u32 %v1355, 2147483648
    %v1401 = vor.u32 1.1754944e-38, %v1400
    %v1402 = vsel %vm1399, %v1401, %v1397
    %v1403 = vmul.f32 %v1337, %v1402
    %v1404 = vrcp.pop %v1358
    %v1405 = vmul.f32 %v1358, %v1404
    %v1406 = vsub.f32 1.0, %v1405
    %v1407 = vmul.f32 %v1404, %v1406
    %v1408 = vadd.f32 %v1404, %v1407
    %vm1409 = vweird.f32 %v1358
    %vm1410 = vweird.f32 %v1404
    %vm1411 = vmor %vm1409, %vm1410
    %v1412 = vsel %vm1411, %v1404, %v1408
    %v1413 = vand.u32 2147483647, %v1358
    %vm1414 = vcmp.eq.f32.partialorder %v1413, 8.507059e+37
    %v1415 = vand.u32 %v1358, 2147483648
    %v1416 = vor.u32 1.1754944e-38, %v1415
    %v1417 = vsel %vm1414, %v1416, %v1412
    %v1418 = vmul.f32 %v1339, %v1417
    %v1419 = vrcp.pop %v1361
    %v1420 = vmul.f32 %v1361, %v1419
    %v1421 = vsub.f32 1.0, %v1420
    %v1422 = vmul.f32 %v1419, %v1421
    %v1423 = vadd.f32 %v1419, %v1422
    %vm1424 = vweird.f32 %v1361
    %vm1425 = vweird.f32 %v1419
    %vm1426 = vmor %vm1424, %vm1425
    %v1427 = vsel %vm1426, %v1419, %v1423
    %v1428 = vand.u32 2147483647, %v1361
    %vm1429 = vcmp.eq.f32.partialorder %v1428, 8.507059e+37
    %v1430 = vand.u32 %v1361, 2147483648
    %v1431 = vor.u32 1.1754944e-38, %v1430
    %v1432 = vsel %vm1429, %v1431, %v1427
    %v1433 = vmul.f32 %v1341, %v1432
    %v1434 = vrcp.pop %v1364
    %v1435 = vmul.f32 %v1364, %v1434
    %v1436 = vsub.f32 1.0, %v1435
    %v1437 = vmul.f32 %v1434, %v1436
    %v1438 = vadd.f32 %v1434, %v1437
    %vm1439 = vweird.f32 %v1364
    %vm1440 = vweird.f32 %v1434
    %vm1441 = vmor %vm1439, %vm1440
    %v1442 = vsel %vm1441, %v1434, %v1438
    %v1443 = vand.u32 2147483647, %v1364
    %vm1444 = vcmp.eq.f32.partialorder %v1443, 8.507059e+37
    %v1445 = vand.u32 %v1364, 2147483648
    %v1446 = vor.u32 1.1754944e-38, %v1445
    %v1447 = vsel %vm1444, %v1446, %v1442
    %v1448 = vmul.f32 %v1343, %v1447
    %v1449 = vrcp.pop %v1367
    %v1450 = vmul.f32 %v1367, %v1449
    %v1451 = vsub.f32 1.0, %v1450
    %v1452 = vmul.f32 %v1449, %v1451
    %v1453 = vadd.f32 %v1449, %v1452
    %vm1454 = vweird.f32 %v1367
    %vm1455 = vweird.f32 %v1449
    %vm1456 = vmor %vm1454, %vm1455
    %v1457 = vsel %vm1456, %v1449, %v1453
    %v1458 = vand.u32 2147483647, %v1367
    %vm1459 = vcmp.eq.f32.partialorder %v1458, 8.507059e+37
    %v1460 = vand.u32 %v1367, 2147483648
    %v1461 = vor.u32 1.1754944e-38, %v1460
    %v1462 = vsel %vm1459, %v1461, %v1457
    %v1463 = vmul.f32 %v1345, %v1462
    %v1464 = vrcp.pop %v1370
    %v1465 = vmul.f32 %v1370, %v1464
    %v1466 = vsub.f32 1.0, %v1465
    %v1467 = vmul.f32 %v1464, %v1466
    %v1468 = vadd.f32 %v1464, %v1467
    %vm1469 = vweird.f32 %v1370
    %vm1470 = vweird.f32 %v1464
    %vm1471 = vmor %vm1469, %vm1470
    %v1472 = vsel %vm1471, %v1464, %v1468
    %v1473 = vand.u32 2147483647, %v1370
    %vm1474 = vcmp.eq.f32.partialorder %v1473, 8.507059e+37
    %v1475 = vand.u32 %v1370, 2147483648
    %v1476 = vor.u32 1.1754944e-38, %v1475
    %v1477 = vsel %vm1474, %v1476, %v1472
    %v1478 = vmul.f32 %v1347, %v1477
    %v1479 = vrcp.pop %v1373
    %v1480 = vmul.f32 %v1373, %v1479
    %v1481 = vsub.f32 1.0, %v1480
    %v1482 = vmul.f32 %v1479, %v1481
    %v1483 = vadd.f32 %v1479, %v1482
    %vm1484 = vweird.f32 %v1373
    %vm1485 = vweird.f32 %v1479
    %vm1486 = vmor %vm1484, %vm1485
    %v1487 = vsel %vm1486, %v1479, %v1483
    %v1488 = vand.u32 2147483647, %v1373
    %vm1489 = vcmp.eq.f32.partialorder %v1488, 8.507059e+37
    %v1490 = vand.u32 %v1373, 2147483648
    %v1491 = vor.u32 1.1754944e-38, %v1490
    %v1492 = vsel %vm1489, %v1491, %v1487
    %v1493 = vmul.f32 %v1349, %v1492
    %1494 = vst.msk [vmem:[#allocation6] sm:$0xff] %vm813, %v1388
    %1495 = vst.msk [vmem:[#allocation6 + $0x8] sm:$0xff] %vm813, %v1403
    %1496 = vst.msk [vmem:[#allocation6 + $0x10] sm:$0xff] %vm813, %v1418
    %1497 = vst.msk [vmem:[#allocation6 + $0x18] sm:$0xff] %vm813, %v1433
    %1498 = vst.msk [vmem:[#allocation6 + $0x20] sm:$0xff] %vm813, %v1448
    %1499 = vst.msk [vmem:[#allocation6 + $0x28] sm:$0xff] %vm813, %v1463
    %1500 = vst.msk [vmem:[#allocation6 + $0x30] sm:$0xff] %vm813, %v1478
    %1501 = vst.msk [vmem:[#allocation6 + $0x38] sm:$0xff] %vm813, %v1493
    %v1502 = vpack.c.bf16 %v1388, %v1388
    %v1503 = vpack.c.bf16 %v1403, %v1403
    %v1504 = vpack.c.bf16 %v1418, %v1418
    %v1505 = vpack.c.bf16 %v1433, %v1433
    %v1506 = vpack.c.bf16 %v1448, %v1448
    %v1507 = vpack.c.bf16 %v1463, %v1463
    %v1508 = vpack.c.bf16 %v1478, %v1478
    %v1509 = vpack.c.bf16 %v1493, %v1493
    %v1510 = vpack.c.bf16 %v158, %v158
    %v1511 = vpack.c.bf16 %v160, %v160
    %v1512 = vpack.c.bf16 %v162, %v162
    %v1513 = vpack.c.bf16 %v164, %v164
    %v1514 = vpack.c.bf16 %v1011, %v1011
    %v1515 = vpack.c.bf16 %v1013, %v1013
    %v1516 = vpack.c.bf16 %v1015, %v1015
    %v1517 = vpack.c.bf16 %v1017, %v1017
    %v1518 = vpack.c.bf16 %v1023, %v1023
    %v1519 = vpack.c.bf16 %v1025, %v1025
    %v1520 = vpack.c.bf16 %v1027, %v1027
    %v1521 = vpack.c.bf16 %v1029, %v1029
    %v1522 = vpack.c.bf16 %v1035, %v1035
    %v1523 = vpack.c.bf16 %v1037, %v1037
    %v1524 = vpack.c.bf16 %v1039, %v1039
    %v1525 = vpack.c.bf16 %v1041, %v1041
    %v1528 = vunpack.c.l.b16 %v1510
    %v1529 = vunpack.c.l.b16 %v1511
    %v1530 = vpack.c.b16 %v1529, %v1528
    %v1533 = vsel %vm813, %v1502, 0
    %1535 = vmatpush.bf16.msra.mxu0 0
    %1536 = vmatpush.bf16.msra.mxu0 0
    %1537 = vmatpush.bf16.msra.mxu0 0
    %1538 = vmatpush.bf16.msra.mxu0 0
    %1539 = vmatpush.bf16.msra.mxu0 0
    %1540 = vmatpush.bf16.msra.mxu0 0
    %1541 = vmatpush.bf16.msra.mxu0 0
    %1542 = vmatpush.bf16.msra.mxu0 %v1530
    %1543 = vmatmul.bf16.gmra.mxu0 %v1533
    %v1544 = vpop.f32.mrf.mxu0
    %v1545 = vadd.f32 0.0, %v1544
    %v1546 = vpop.f32.mrf.mxu0
    %1547 = vdwg.mxu0
    %v1550 = vunpack.c.l.b16 %v1512
    %v1551 = vunpack.c.l.b16 %v1513
    %v1552 = vpack.c.b16 %v1551, %v1550
    %v1555 = vsel %vm813, %v1503, 0
    %1557 = vmatpush.bf16.msra.mxu0 0
    %1558 = vmatpush.bf16.msra.mxu0 0
    %1559 = vmatpush.bf16.msra.mxu0 0
    %1560 = vmatpush.bf16.msra.mxu0 0
    %1561 = vmatpush.bf16.msra.mxu0 0
    %1562 = vmatpush.bf16.msra.mxu0 0
    %1563 = vmatpush.bf16.msra.mxu0 0
    %1564 = vmatpush.bf16.msra.mxu0 %v1552
    %1565 = vmatmul.bf16.gmra.mxu0 %v1555
    %v1566 = vpop.f32.mrf.mxu0
    %v1567 = vadd.f32 0.0, %v1566
    %v1568 = vpop.f32.mrf.mxu0
    %1569 = vdwg.mxu0
    %v1572 = vunpack.c.l.b16 %v1514
    %v1573 = vunpack.c.l.b16 %v1515
    %v1574 = vpack.c.b16 %v1573, %v1572
    %v1577 = vsel %vm813, %v1504, 0
    %1579 = vmatpush.bf16.msra.mxu0 0
    %1580 = vmatpush.bf16.msra.mxu0 0
    %1581 = vmatpush.bf16.msra.mxu0 0
    %1582 = vmatpush.bf16.msra.mxu0 0
    %1583 = vmatpush.bf16.msra.mxu0 0
    %1584 = vmatpush.bf16.msra.mxu0 0
    %1585 = vmatpush.bf16.msra.mxu0 0
    %1586 = vmatpush.bf16.msra.mxu0 %v1574
    %1587 = vmatmul.bf16.gmra.mxu0 %v1577
    %v1588 = vpop.f32.mrf.mxu0
    %v1589 = vadd.f32 0.0, %v1588
    %v1590 = vpop.f32.mrf.mxu0
    %1591 = vdwg.mxu0
    %v1594 = vunpack.c.l.b16 %v1516
    %v1595 = vunpack.c.l.b16 %v1517
    %v1596 = vpack.c.b16 %v1595, %v1594
    %v1599 = vsel %vm813, %v1505, 0
    %1601 = vmatpush.bf16.msra.mxu0 0
    %1602 = vmatpush.bf16.msra.mxu0 0
    %1603 = vmatpush.bf16.msra.mxu0 0
    %1604 = vmatpush.bf16.msra.mxu0 0
    %1605 = vmatpush.bf16.msra.mxu0 0
    %1606 = vmatpush.bf16.msra.mxu0 0
    %1607 = vmatpush.bf16.msra.mxu0 0
    %1608 = vmatpush.bf16.msra.mxu0 %v1596
    %1609 = vmatmul.bf16.gmra.mxu0 %v1599
    %v1610 = vpop.f32.mrf.mxu0
    %v1611 = vadd.f32 0.0, %v1610
    %v1612 = vpop.f32.mrf.mxu0
    %1613 = vdwg.mxu0
    %v1616 = vunpack.c.l.b16 %v1518
    %v1617 = vunpack.c.l.b16 %v1519
    %v1618 = vpack.c.b16 %v1617, %v1616
    %v1621 = vsel %vm813, %v1506, 0
    %1623 = vmatpush.bf16.msra.mxu0 0
    %1624 = vmatpush.bf16.msra.mxu0 0
    %1625 = vmatpush.bf16.msra.mxu0 0
    %1626 = vmatpush.bf16.msra.mxu0 0
    %1627 = vmatpush.bf16.msra.mxu0 0
    %1628 = vmatpush.bf16.msra.mxu0 0
    %1629 = vmatpush.bf16.msra.mxu0 0
    %1630 = vmatpush.bf16.msra.mxu0 %v1618
    %1631 = vmatmul.bf16.gmra.mxu0 %v1621
    %v1632 = vpop.f32.mrf.mxu0
    %v1633 = vadd.f32 0.0, %v1632
    %v1634 = vpop.f32.mrf.mxu0
    %1635 = vdwg.mxu0
    %v1638 = vunpack.c.l.b16 %v1520
    %v1639 = vunpack.c.l.b16 %v1521
    %v1640 = vpack.c.b16 %v1639, %v1638
    %v1643 = vsel %vm813, %v1507, 0
    %1645 = vmatpush.bf16.msra.mxu0 0
    %1646 = vmatpush.bf16.msra.mxu0 0
    %1647 = vmatpush.bf16.msra.mxu0 0
    %1648 = vmatpush.bf16.msra.mxu0 0
    %1649 = vmatpush.bf16.msra.mxu0 0
    %1650 = vmatpush.bf16.msra.mxu0 0
    %1651 = vmatpush.bf16.msra.mxu0 0
    %1652 = vmatpush.bf16.msra.mxu0 %v1640
    %1653 = vmatmul.bf16.gmra.mxu0 %v1643
    %v1654 = vpop.f32.mrf.mxu0
    %v1655 = vadd.f32 0.0, %v1654
    %v1656 = vpop.f32.mrf.mxu0
    %1657 = vdwg.mxu0
    %v1660 = vunpack.c.l.b16 %v1522
    %v1661 = vunpack.c.l.b16 %v1523
    %v1662 = vpack.c.b16 %v1661, %v1660
    %v1665 = vsel %vm813, %v1508, 0
    %1667 = vmatpush.bf16.msra.mxu0 0
    %1668 = vmatpush.bf16.msra.mxu0 0
    %1669 = vmatpush.bf16.msra.mxu0 0
    %1670 = vmatpush.bf16.msra.mxu0 0
    %1671 = vmatpush.bf16.msra.mxu0 0
    %1672 = vmatpush.bf16.msra.mxu0 0
    %1673 = vmatpush.bf16.msra.mxu0 0
    %1674 = vmatpush.bf16.msra.mxu0 %v1662
    %1675 = vmatmul.bf16.gmra.mxu0 %v1665
    %v1676 = vpop.f32.mrf.mxu0
    %v1677 = vadd.f32 0.0, %v1676
    %v1678 = vpop.f32.mrf.mxu0
    %1679 = vdwg.mxu0
    %v1682 = vunpack.c.l.b16 %v1524
    %v1683 = vunpack.c.l.b16 %v1525
    %v1684 = vpack.c.b16 %v1683, %v1682
    %v1687 = vsel %vm813, %v1509, 0
    %1689 = vmatpush.bf16.msra.mxu0 0
    %1690 = vmatpush.bf16.msra.mxu0 0
    %1691 = vmatpush.bf16.msra.mxu0 0
    %1692 = vmatpush.bf16.msra.mxu0 0
    %1693 = vmatpush.bf16.msra.mxu0 0
    %1694 = vmatpush.bf16.msra.mxu0 0
    %1695 = vmatpush.bf16.msra.mxu0 0
    %1696 = vmatpush.bf16.msra.mxu0 %v1684
    %1697 = vmatmul.bf16.gmra.mxu0 %v1687
    %v1698 = vpop.f32.mrf.mxu0
    %v1699 = vadd.f32 0.0, %v1698
    %v1700 = vpop.f32.mrf.mxu0
    %1701 = vdwg.mxu0
    %1704 = vrot.lane.b32.xlu0 %v1589, 8
    %v1705 = vpop.permute.xlu0 %1704
    %1706 = vrot.lane.b32.xlu0 %v1611, 8
    %v1707 = vpop.permute.xlu0 %1706
    %1712 = vrot.lane.b32.xlu0 %v1633, 16
    %v1713 = vpop.permute.xlu0 %1712
    %1714 = vrot.lane.b32.xlu0 %v1655, 16
    %v1715 = vpop.permute.xlu0 %1714
    %1720 = vrot.lane.b32.xlu0 %v1677, 24
    %v1721 = vpop.permute.xlu0 %1720
    %1722 = vrot.lane.b32.xlu0 %v1699, 24
    %v1723 = vpop.permute.xlu0 %1722
    %v1726 = vsel %vm200, %v1545, %v1705
    %v1727 = vsel %vm200, %v1567, %v1707
    %v1728 = vsel %vm813, %v1726, %v1713
    %v1729 = vsel %vm813, %v1727, %v1715
    %v1730 = vsel %vm816, %v1728, %v1721
    %v1731 = vsel %vm816, %v1729, %v1723
    %v1732 = vpack.c.bf16 %v1731, %v1730
    %v1733 = vperm.slane %v38, 6
    %1734 = vrot.lane.b32.xlu0 %v829, 64
    %v1735 = vpop.permute.xlu0 %1734
    %1736 = vrot.lane.b32.xlu0 %v830, 64
    %v1737 = vpop.permute.xlu0 %1736
    %v1741 = vsel %vm93, %v1732, 0
    %1743 = vmatpush.bf16.msra.mxu0 0
    %1744 = vmatpush.bf16.msra.mxu0 0
    %1745 = vmatpush.bf16.msra.mxu0 0
    %1746 = vmatpush.bf16.msra.mxu0 0
    %1747 = vmatpush.bf16.msra.mxu0 0
    %1748 = vmatpush.bf16.msra.mxu0 0
    %1749 = vmatpush.bf16.msra.mxu0 %v1737
    %1750 = vmatpush.bf16.msra.mxu0 %v1735
    %1751 = vmatmul.bf16.gmra.mxu0 %v1741
    %v1752 = vpop.f32.mrf.mxu0
    %v1753 = vadd.f32 %v1733, %v1752
    %v1754 = vpop.f32.mrf.mxu0
    %v1755 = vadd.f32 %v1733, %v1754
    %1756 = vdwg.mxu0
    %v1757 = vadd.f32 %v1753, %v923
    %v1758 = vadd.f32 %v1755, %v924
    %v1759 = vsel %vm93, %v1757, 0.0
    %1760 = vadd.xlane.f32.xlu0 %v1759
    %v1761 = vpop.xlane.xlu0 %1760
    %v1762 = vsel %vm93, %v1758, 0.0
    %1763 = vadd.xlane.f32.xlu0 %v1762
    %v1764 = vpop.xlane.xlu0 %1763
    %v1765 = vmul.f32 %v1761, %v868
    %v1766 = vmul.f32 %v1764, %v868
    %v1767 = vsub.f32 %v1757, %v1765
    %v1768 = vsub.f32 %v1758, %v1766
    %v1769 = vmul.f32 %v1767, %v1767
    %v1770 = vmul.f32 %v1768, %v1768
    %v1771 = vsel %vm93, %v1769, 0.0
    %1772 = vadd.xlane.f32.xlu0 %v1771
    %v1773 = vpop.xlane.xlu0 %1772
    %v1774 = vsel %vm93, %v1770, 0.0
    %1775 = vadd.xlane.f32.xlu0 %v1774
    %v1776 = vpop.xlane.xlu0 %1775
    %v1777 = vmul.f32 %v1773, %v868
    %v1778 = vmul.f32 %v1776, %v868
    %v1779 = vadd.f32 %v1777, 1e-05
    %v1780 = vadd.f32 %v1778, 1e-05
    %v1781 = vrsqrt.pop %v1779
    %v1782 = vmul.f32 %v1781, %v1779
    %v1783 = vmul.f32 %v1782, %v1781
    %v1784 = vmul.f32 0.5, %v1783
    %v1785 = vsub.f32 1.5, %v1784
    %v1786 = vmul.f32 %v1781, %v1785
    %vm1787 = vweird.f32 %v1779
    %vm1788 = vweird.f32 %v1781
    %vm1789 = vmor %vm1787, %vm1788
    %v1790 = vsel %vm1789, %v1781, %v1786
    %v1791 = vrsqrt.pop %v1780
    %v1792 = vmul.f32 %v1791, %v1780
    %v1793 = vmul.f32 %v1792, %v1791
    %v1794 = vmul.f32 0.5, %v1793
    %v1795 = vsub.f32 1.5, %v1794
    %v1796 = vmul.f32 %v1791, %v1795
    %vm1797 = vweird.f32 %v1780
    %vm1798 = vweird.f32 %v1791
    %vm1799 = vmor %vm1797, %vm1798
    %v1800 = vsel %vm1799, %v1791, %v1796
    %v1801 = vmul.f32 %v1767, %v1790
    %v1802 = vmul.f32 %v1768, %v1800
    %v1803 = vperm.slane %v38, 7
    %v1804 = vmul.f32 %v1801, %v1803
    %v1805 = vmul.f32 %v1802, %v1803
    %v1806 = vperm.slane %v39, 0
    %v1807 = vadd.f32 %v1804, %v1806
    %v1808 = vadd.f32 %v1805, %v1806
    %v1809 = vmul.f32 %v1807, %v916
    %v1810 = vmul.f32 %v1808, %v921
    %v1811 = vpack.c.bf16 %v1810, %v1809
    %v1812 = vld [vmem:[%s6] sm:$0xf]
    %v1813 = vld [vmem:[%s6 + $0x4] sm:$0xf]
    %v1814 = vld [vmem:[%s6 + $0x8] sm:$0xf]
    %v1815 = vld [vmem:[%s6 + $0xc] sm:$0xf]
    %v1816 = vperm.slane %v39, 1
    %v1821 = vunpack.c.l.b16 %v1812
    %v1822 = vunpack.c.l.b16 %v1813
    %v1823 = vunpack.c.l.b16 %v1814
    %v1824 = vunpack.c.l.b16 %v1815
    %v1825 = vpack.c.b16 %v1822, %v1821
    %v1826 = vpack.c.b16 %v1824, %v1823
    %v1830 = vsel %vm93, %v1811, 0
    %1832 = vmatpush.bf16.msra.mxu0 0
    %1833 = vmatpush.bf16.msra.mxu0 0
    %1834 = vmatpush.bf16.msra.mxu0 0
    %1835 = vmatpush.bf16.msra.mxu0 0
    %1836 = vmatpush.bf16.msra.mxu0 0
    %1837 = vmatpush.bf16.msra.mxu0 0
    %1838 = vmatpush.bf16.msra.mxu0 %v1826
    %1839 = vmatpush.bf16.msra.mxu0 %v1825
    %1840 = vmatmul.bf16.gmra.mxu0 %v1830
    %v1841 = vpop.f32.mrf.mxu0
    %v1842 = vadd.f32 %v1816, %v1841
    %v1843 = vpop.f32.mrf.mxu0
    %v1844 = vadd.f32 %v1816, %v1843
    %1845 = vdwg.mxu0
    %v1846 = vmax.f32 %v1842, 0.0
    %v1847 = vmax.f32 %v1844, 0.0
    %v1848 = vpack.c.bf16 %v1847, %v1846
    %v1849 = vld [vmem:[%s7] sm:$0xf]
    %v1850 = vld [vmem:[%s7 + $0x4] sm:$0xf]
    %v1851 = vld [vmem:[%s7 + $0x8] sm:$0xf]
    %v1852 = vld [vmem:[%s7 + $0xc] sm:$0xf]
    %v1853 = vld [vmem:[%s7 + $0x10] sm:$0xf]
    %v1854 = vld [vmem:[%s7 + $0x14] sm:$0xf]
    %v1855 = vld [vmem:[%s7 + $0x18] sm:$0xf]
    %v1856 = vld [vmem:[%s7 + $0x1c] sm:$0xf]
    %v1857 = vperm.slane %v39, 2
    %v1866 = vunpack.c.l.b16 %v1849
    %v1867 = vunpack.c.l.b16 %v1850
    %v1868 = vunpack.c.l.b16 %v1851
    %v1869 = vunpack.c.l.b16 %v1852
    %v1870 = vunpack.c.l.b16 %v1853
    %v1871 = vunpack.c.l.b16 %v1854
    %v1872 = vunpack.c.l.b16 %v1855
    %v1873 = vunpack.c.l.b16 %v1856
    %v1874 = vpack.c.b16 %v1867, %v1866
    %v1875 = vpack.c.b16 %v1869, %v1868
    %v1876 = vpack.c.b16 %v1871, %v1870
    %v1877 = vpack.c.b16 %v1873, %v1872
    %vm1882 = vcmask 523264
    %v1884 = vsel %vm1882, %v1848, 0
    %1886 = vmatpush.bf16.msra.mxu0 0
    %1887 = vmatpush.bf16.msra.mxu0 0
    %1888 = vmatpush.bf16.msra.mxu0 0
    %1889 = vmatpush.bf16.msra.mxu0 0
    %1890 = vmatpush.bf16.msra.mxu0 %v1877
    %1891 = vmatpush.bf16.msra.mxu0 %v1876
    %1892 = vmatpush.bf16.msra.mxu0 %v1875
    %1893 = vmatpush.bf16.msra.mxu0 %v1874
    %1894 = vmatmul.bf16.gmra.mxu0 %v1884
    %v1895 = vpop.f32.mrf.mxu0
    %v1896 = vadd.f32 %v1857, %v1895
    %v1897 = vpop.f32.mrf.mxu0
    %v1898 = vadd.f32 %v1857, %v1897
    %1899 = vdwg.mxu0
    %v1900 = vadd.f32 %v1896, %v1809
    %v1901 = vadd.f32 %v1898, %v1810
    %v1902 = vsel %vm93, %v1900, 0.0
    %1903 = vadd.xlane.f32.xlu0 %v1902
    %v1904 = vpop.xlane.xlu0 %1903
    %v1905 = vsel %vm93, %v1901, 0.0
    %1906 = vadd.xlane.f32.xlu0 %v1905
    %v1907 = vpop.xlane.xlu0 %1906
    %v1908 = vmul.f32 %v1904, %v868
    %v1909 = vmul.f32 %v1907, %v868
    %v1910 = vsub.f32 %v1900, %v1908
    %v1911 = vsub.f32 %v1901, %v1909
    %v1912 = vmul.f32 %v1910, %v1910
    %v1913 = vmul.f32 %v1911, %v1911
    %v1914 = vsel %vm93, %v1912, 0.0
    %1915 = vadd.xlane.f32.xlu0 %v1914
    %v1916 = vpop.xlane.xlu0 %1915
    %v1917 = vsel %vm93, %v1913, 0.0
    %1918 = vadd.xlane.f32.xlu0 %v1917
    %v1919 = vpop.xlane.xlu0 %1918
    %v1920 = vmul.f32 %v1916, %v868
    %v1921 = vmul.f32 %v1919, %v868
    %v1922 = vadd.f32 %v1920, 1e-05
    %v1923 = vadd.f32 %v1921, 1e-05
    %v1924 = vrsqrt.pop %v1922
    %v1925 = vmul.f32 %v1924, %v1922
    %v1926 = vmul.f32 %v1925, %v1924
    %v1927 = vmul.f32 0.5, %v1926
    %v1928 = vsub.f32 1.5, %v1927
    %v1929 = vmul.f32 %v1924, %v1928
    %vm1930 = vweird.f32 %v1922
    %vm1931 = vweird.f32 %v1924
    %vm1932 = vmor %vm1930, %vm1931
    %v1933 = vsel %vm1932, %v1924, %v1929
    %v1934 = vrsqrt.pop %v1923
    %v1935 = vmul.f32 %v1934, %v1923
    %v1936 = vmul.f32 %v1935, %v1934
    %v1937 = vmul.f32 0.5, %v1936
    %v1938 = vsub.f32 1.5, %v1937
    %v1939 = vmul.f32 %v1934, %v1938
    %vm1940 = vweird.f32 %v1923
    %vm1941 = vweird.f32 %v1934
    %vm1942 = vmor %vm1940, %vm1941
    %v1943 = vsel %vm1942, %v1934, %v1939
    %v1944 = vmul.f32 %v1910, %v1933
    %v1945 = vmul.f32 %v1911, %v1943
    %v1946 = vperm.slane %v39, 3
    %v1947 = vmul.f32 %v1944, %v1946
    %v1948 = vmul.f32 %v1945, %v1946
    %v1949 = vperm.slane %v39, 4
    %v1950 = vadd.f32 %v1947, %v1949
    %v1951 = vadd.f32 %v1948, %v1949
    %v1952 = vmul.f32 %v1950, %v916
    %v1953 = vmul.f32 %v1951, %v921
    %1954 = vst.msk [vmem:[#allocation2] sm:$0xff] %vm93, %v1952
    %1955 = vst.msk [vmem:[#allocation2 + $0x8] sm:$0xff] %vm93, %v1953
    // Predicated region
    $region38: #{decoder_layer.1} parent=1 // pred_check
      _
    $region39: #{decoder_layer.1} parent=1 // pred_check_branch
      %1957 = sbr.rel (0) target = $region41
    $region40: #{decoder_layer.1} parent=1 // pred_region
      %1959 = vsyncadd [#allocation3], 0
      %s1960 = sshll.u32 [#allocation2], 4
      %s1961 = int_to_ptr.vmem [resolvable:$true] %s1960
      %s1962 = sshll.u32 %s9, 4
      %s1963 = int_to_ptr.hbm [resolvable:$true] %s1962
      %1968 = dma.vmem_to_hbm [thread:$0]  %s1961, 256, %s1963, [#allocation3], 128, 128, 8
    $region41: #{decoder_layer.1} parent=1 // pred_fallthru
      _
    // Predicated region
    $region42: #{decoder_layer.1} parent=1 // pred_check
      _
    $region43: #{decoder_layer.1} parent=1 // pred_check_branch
      %1970 = sbr.rel (0) target = $region45
    $region44: #{decoder_layer.1} parent=1 // pred_region
      %1972 = vsyncadd [#allocation5], 0
      %s1973 = sshll.u32 [#allocation4], 4
      %s1974 = int_to_ptr.vmem [resolvable:$true] %s1973
      %s1975 = sshll.u32 %s10, 4
      %s1976 = int_to_ptr.hbm [resolvable:$true] %s1975
      %1981 = dma.vmem_to_hbm [thread:$0]  %s1974, 1024, %s1976, [#allocation5], 128, 128, 8
    $region45: #{decoder_layer.1} parent=1 // pred_fallthru
      _
    // Predicated region
    $region46: #{decoder_layer.1} parent=1 // pred_check
      _
    $region47: #{decoder_layer.1} parent=1 // pred_check_branch
      %1983 = sbr.rel (0) target = $region49
    $region48: #{decoder_layer.1} parent=1 // pred_region
      %1985 = vsyncadd [#allocation5], 0
      %s1986 = sshll.u32 [#allocation6], 4
      %s1987 = int_to_ptr.vmem [resolvable:$true] %s1986
      %s1988 = sshll.u32 %s11, 4
      %s1989 = int_to_ptr.hbm [resolvable:$true] %s1988
      %1994 = dma.vmem_to_hbm [thread:$0]  %s1987, 1024, %s1989, [#allocation5], 128, 128, 8
    $region49: #{decoder_layer.1} parent=1 // pred_fallthru
      _
    // Predicated region
    $region50: #{decoder_layer.1} parent=1 // pred_check
      _
    $region51: #{decoder_layer.1} parent=1 // pred_check_branch
      %1996 = sbr.rel (0) target = $region53
    $region52: #{decoder_layer.1} parent=1 // pred_region
      %1998 = dma.done [#allocation3], 256
    $region53: #{decoder_layer.1} parent=1 // pred_fallthru
      _
    // Predicated region
    $region54: #{decoder_layer.1} parent=1 // pred_check
      _
    $region55: #{decoder_layer.1} parent=1 // pred_check_branch
      %2000 = sbr.rel (0) target = $region57
    $region56: #{decoder_layer.1} parent=1 // pred_region
      %2002 = dma.done [#allocation5], 1024
    $region57: #{decoder_layer.1} parent=1 // pred_fallthru
      _
    // Predicated region
    $region58: #{decoder_layer.1} parent=1 // pred_check
      _
    $region59: #{decoder_layer.1} parent=1 // pred_check_branch
      %2004 = sbr.rel (0) target = $region61
    $region60: #{decoder_layer.1} parent=1 // pred_region
      %2006 = dma.done [#allocation5], 1024
    $region61: #{decoder_layer.1} parent=1 // pred_fallthru
      _
    %2007 = vsyncpa [#allocation3], 1
    %2008 = vsyncpa [#allocation5], 1

</llo_original>
